<compile_context>
chip_gen: v7x
topology: tpu7x:2x2x1
jax: 0.10.0
libtpu: 0.0.40
codegen_flags: <defaults>
</compile_context>

<pallas_src>
import math

import numpy as np
import jax
import jax.numpy as jnp
from jax import lax
from jax.experimental import pallas as pl
from jax.experimental.pallas import tpu as pltpu


def _make_dwconv_kernel(h, w, C, k, p, strip):
    """Fused depthwise k x k 'same' conv on one (h, w, C) image."""
    n_strips = h // strip
    hp, wp = h + 2 * p, w + 2 * p

    def kernel(x_ref, w_ref, b_ref, o_ref, pad_ref):
        # ---- zero only the halo of the padded scratch; the interior is fully
        # overwritten below.  Redone every step (cheap) so the batch axis can
        # be "parallel" (the scratch is per-core under megacore sharding).
        pad_ref[0:p, :, :] = jnp.zeros((p, wp, C), jnp.float32)
        pad_ref[h + p:, :, :] = jnp.zeros((p, wp, C), jnp.float32)
        pad_ref[:, 0:p, :] = jnp.zeros((hp, p, C), jnp.float32)
        pad_ref[:, w + p:, :] = jnp.zeros((hp, p, C), jnp.float32)
        # ---- interior: current image (no in-kernel reshape needed).
        pad_ref[p:p + h, p:p + w, :] = x_ref[0]

        w_all = w_ref[...]                      # (k*k, C) depthwise taps
        bias = b_ref[...].reshape(1, 1, C)      # (1, 1, C)

        # ---- k*k shifted multiply-accumulate, in row strips so the live
        # accumulator stays small regardless of resolution.
        def strip_body(s, carry):
            r0 = pl.multiple_of(s * strip, strip)
            acc = jnp.zeros((strip, w, C), jnp.float32)
            for dy in range(k):
                for dx in range(k):
                    tap = pad_ref[pl.ds(r0 + dy, strip), dx:dx + w, :]
                    acc = acc + tap * w_all[dy * k + dx].reshape(1, 1, C)
            o_ref[0, pl.ds(r0, strip), :, :] = (acc + bias).astype(o_ref.dtype)
            return carry

        lax.fori_loop(0, n_strips, strip_body, 0, unroll=True)

    return kernel


def dwconv_level(x_nhwc, w, b, k=3):
    """Depthwise k x k conv (stride 1, padding (k-1)//2, groups=C) on NHWC."""
    B, h, ww, C = x_nhwc.shape
    p = (k - 1) // 2
    strip = math.gcd(h, 8)      # largest power-of-two row strip <= 8 dividing h
    kernel = _make_dwconv_kernel(h, ww, C, k, p, strip)

    return pl.pallas_call(
        kernel,
        out_shape=jax.ShapeDtypeStruct((B, h, ww, C), x_nhwc.dtype),
        grid_spec=pltpu.PrefetchScalarGridSpec(
            num_scalar_prefetch=0,
            grid=(B,),
            in_specs=[
                pl.BlockSpec((1, h, ww, C), lambda bb: (bb, 0, 0, 0)),
                pl.BlockSpec(w.shape, lambda bb: (0, 0)),
                pl.BlockSpec(b.shape, lambda bb: (0, 0)),
            ],
            out_specs=pl.BlockSpec((1, h, ww, C), lambda bb: (bb, 0, 0, 0)),
            scratch_shapes=[
                pltpu.VMEM((h + 2 * p, ww + 2 * p, C), jnp.float32)],
        ),
        compiler_params=pltpu.CompilerParams(
            dimension_semantics=("parallel",)),   # batch images are independent
    )(x_nhwc, w, b)


def dwconv_forward(x, H, W, w, b):
    """DWConv.forward: x (B, N, C), N = 21 * (H*W // 4) -> (B, N, C).

    w: (k*k, C) depthwise taps; for real PyTorch Conv2d weights of shape
    (C, 1, k, k) the mapping is w = torch_weight.reshape(C, k*k).T.
    b: (1, C) bias.
    """
    B, N, C = x.shape
    n = N // 21

    # Lane density: pad channels to a multiple of 128 (no-op for dim=768).
    Cp = ((C + 127) // 128) * 128
    if Cp != C:
        x = jnp.pad(x, ((0, 0), (0, 0), (0, Cp - C)))
        w = jnp.pad(w, ((0, 0), (0, Cp - C)))
        b = jnp.pad(b, ((0, 0), (0, Cp - C)))

    # PyTorch slice.transpose(1,2).view(B,C,h,w) == channels-last reshape.
    x1 = x[:, 0:16 * n, :].reshape(B, 2 * H, 2 * W, Cp)
    x2 = x[:, 16 * n:20 * n, :].reshape(B, H, W, Cp)
    x3 = x[:, 20 * n:, :].reshape(B, H // 2, W // 2, Cp)

    # TODO(synk): the three levels run as three pallas_calls because their
    # spatial block shapes differ; fusing them into one call would need
    # per-level scalar-prefetched offsets and a shared padded canvas.
    y1 = dwconv_level(x1, w, b).reshape(B, -1, Cp)
    y2 = dwconv_level(x2, w, b).reshape(B, -1, Cp)
    y3 = dwconv_level(x3, w, b).reshape(B, -1, Cp)

    # PyTorch flatten(2).transpose(1,2) == row-major NHWC reshape to (B, hw, C).
    y = jnp.concatenate([y1, y2, y3], axis=1)
    return y[:, :, :C]


if __name__ == "__main__":
    B, C, H, W = 2, 128, 8, 8          # levels: 16x16, 8x8, 4x4
    n = (H * W) // 4                   # 16
    N = 21 * n                         # 336 tokens = 16n + 4n + n

    key = jax.random.PRNGKey(0)
    kx, kw, kb = jax.random.split(key, 3)
    x = jax.random.normal(kx, (B, N, C), jnp.float32)

    # Depthwise Conv2d(C, C, 3, padding=1, groups=C, bias=True) parameters,
    # stored as taps (k*k, C) and bias (1, C). PyTorch-style uniform init.
    k = 3
    scale = 1.0 / np.sqrt(k * k)
    w_dw = jax.random.uniform(kw, (k * k, C), jnp.float32, -scale, scale)
    b_dw = jax.random.uniform(kb, (1, C), jnp.float32, -scale, scale)

    out = dwconv_forward(x, H, W, w_dw, b_dw)
    jax.block_until_ready(out)
    assert out.shape == (B, N, C), out.shape

    # ---- pure-JAX reference (lax depthwise conv) to validate semantics.
    def ref_level(img):  # img: (B, h, w, C)
        kern = w_dw.reshape(k, k, 1, C)
        y = lax.conv_general_dilated(
            img, kern, window_strides=(1, 1), padding="SAME",
            dimension_numbers=("NHWC", "HWIO", "NHWC"),
            feature_group_count=C)
        return y + b_dw.reshape(1, 1, 1, C)

    x1 = x[:, 0:16 * n, :].reshape(B, 2 * H, 2 * W, C)
    x2 = x[:, 16 * n:20 * n, :].reshape(B, H, W, C)
    x3 = x[:, 20 * n:, :].reshape(B, H // 2, W // 2, C)
    ref = jnp.concatenate([ref_level(x1).reshape(B, -1, C),
                           ref_level(x2).reshape(B, -1, C),
                           ref_level(x3).reshape(B, -1, C)], axis=1)
    np.testing.assert_allclose(np.asarray(out), np.asarray(ref),
                               rtol=1e-5, atol=1e-5)
    print("KERNEL_OK")
</pallas_src>

<mosaic_0001>
module attributes {stable_mosaic.version = 11 : i64} {
  func.func @kernel(%arg0: i32, %arg1: memref<1x16x16x128xf32, #tpu.memory_space<vmem>>, %arg2: memref<9x128xf32, #tpu.memory_space<vmem>>, %arg3: memref<1x128xf32, #tpu.memory_space<vmem>>, %arg4: memref<1x16x16x128xf32, #tpu.memory_space<vmem>>, %arg5: memref<18x18x128xf32, #tpu.memory_space<vmem>>) attributes {dimension_semantics = [#tpu.dimension_semantics<parallel>], iteration_bounds = array<i64: 2>, scalar_prefetch = 0 : i64, scratch_operands = 1 : i64, tpu.core_type = #tpu.core_type<tc>, window_params = [{transform_indices = @transform_0, window_bounds = array<i64: 1, 16, 16, 128>}, {pipeline_mode = #tpu.pipeline_mode<synchronous>, transform_indices = @transform_1, window_bounds = array<i64: 9, 128>}, {pipeline_mode = #tpu.pipeline_mode<synchronous>, transform_indices = @transform_2, window_bounds = array<i64: 1, 128>}, {transform_indices = @transform_3, window_bounds = array<i64: 1, 16, 16, 128>}]} {
    %cst = arith.constant 0.000000e+00 : f32
    %0 = vector.broadcast %cst : f32 to vector<1x18x128xf32>
    %c0 = arith.constant 0 : index
    %c0_0 = arith.constant 0 : index
    %c0_1 = arith.constant 0 : index
    %1 = vector.load %arg5[%c0, %c0_0, %c0_1] : memref<18x18x128xf32, #tpu.memory_space<vmem>>, vector<1x18x128xf32>
    tpu.vector_store %arg5[%c0, %c0_0, %c0_1], %0 {strides = array<i32>} : memref<18x18x128xf32, #tpu.memory_space<vmem>>, vector<1x18x128xf32>,
    %cst_2 = arith.constant 0.000000e+00 : f32
    %2 = vector.broadcast %cst_2 : f32 to vector<1x18x128xf32>
    %c17 = arith.constant 17 : index
    %c0_3 = arith.constant 0 : index
    %c0_4 = arith.constant 0 : index
    %3 = vector.load %arg5[%c17, %c0_3, %c0_4] : memref<18x18x128xf32, #tpu.memory_space<vmem>>, vector<1x18x128xf32>
    tpu.vector_store %arg5[%c17, %c0_3, %c0_4], %2 {strides = array<i32>} : memref<18x18x128xf32, #tpu.memory_space<vmem>>, vector<1x18x128xf32>,
    %cst_5 = arith.constant 0.000000e+00 : f32
    %4 = vector.broadcast %cst_5 : f32 to vector<18x1x128xf32>
    %c0_6 = arith.constant 0 : index
    %c0_7 = arith.constant 0 : index
    %c0_8 = arith.constant 0 : index
    %5 = vector.load %arg5[%c0_6, %c0_7, %c0_8] : memref<18x18x128xf32, #tpu.memory_space<vmem>>, vector<18x1x128xf32>
    tpu.vector_store %arg5[%c0_6, %c0_7, %c0_8], %4 {strides = array<i32>} : memref<18x18x128xf32, #tpu.memory_space<vmem>>, vector<18x1x128xf32>,
    %cst_9 = arith.constant 0.000000e+00 : f32
    %6 = vector.broadcast %cst_9 : f32 to vector<18x1x128xf32>
    %c0_10 = arith.constant 0 : index
    %c17_11 = arith.constant 17 : index
    %c0_12 = arith.constant 0 : index
    %7 = vector.load %arg5[%c0_10, %c17_11, %c0_12] : memref<18x18x128xf32, #tpu.memory_space<vmem>>, vector<18x1x128xf32>
    tpu.vector_store %arg5[%c0_10, %c17_11, %c0_12], %6 {strides = array<i32>} : memref<18x18x128xf32, #tpu.memory_space<vmem>>, vector<18x1x128xf32>,
    %c0_13 = arith.constant 0 : index
    %c0_14 = arith.constant 0 : index
    %c0_15 = arith.constant 0 : index
    %c0_16 = arith.constant 0 : index
    %8 = vector.load %arg1[%c0_13, %c0_14, %c0_15, %c0_16] : memref<1x16x16x128xf32, #tpu.memory_space<vmem>>, vector<1x16x16x128xf32>
    %9 = vector.shape_cast %8 : vector<1x16x16x128xf32> to vector<16x16x128xf32>
    %c1 = arith.constant 1 : index
    %c1_17 = arith.constant 1 : index
    %c0_18 = arith.constant 0 : index
    %10 = vector.load %arg5[%c1, %c1_17, %c0_18] : memref<18x18x128xf32, #tpu.memory_space<vmem>>, vector<16x16x128xf32>
    tpu.vector_store %arg5[%c1, %c1_17, %c0_18], %9 {strides = array<i32>} : memref<18x18x128xf32, #tpu.memory_space<vmem>>, vector<16x16x128xf32>,
    %c0_19 = arith.constant 0 : index
    %c0_20 = arith.constant 0 : index
    %11 = vector.load %arg2[%c0_19, %c0_20] : memref<9x128xf32, #tpu.memory_space<vmem>>, vector<9x128xf32>
    %c0_21 = arith.constant 0 : index
    %c0_22 = arith.constant 0 : index
    %12 = vector.load %arg3[%c0_21, %c0_22] : memref<1x128xf32, #tpu.memory_space<vmem>>, vector<1x128xf32>
    %13 = vector.shape_cast %12 : vector<1x128xf32> to vector<1x1x128xf32>
    %c0_i32 = arith.constant 0 : i32
    %c8_i32 = arith.constant 8 : i32
    %14 = arith.muli %c0_i32, %c8_i32 : i32
    %15 = tpu.assume_multiple %14, 8 : i32
    %cst_23 = arith.constant 0.000000e+00 : f32
    %16 = vector.broadcast %cst_23 : f32 to vector<8x16x128xf32>
    %c0_i32_24 = arith.constant 0 : i32
    %17 = arith.addi %15, %c0_i32_24 : i32
    %18 = arith.index_cast %17 : i32 to index
    %c0_25 = arith.constant 0 : index
    %c0_26 = arith.constant 0 : index
    %19 = vector.load %arg5[%18, %c0_25, %c0_26] : memref<18x18x128xf32, #tpu.memory_space<vmem>>, vector<8x16x128xf32>
    %20 = vector.extract_strided_slice %11 {offsets = [0, 0], sizes = [1, 128], strides = [1, 1]} : vector<9x128xf32> to vector<1x128xf32>
    %21 = vector.shape_cast %20 : vector<1x128xf32> to vector<128xf32>
    %22 = vector.shape_cast %21 : vector<128xf32> to vector<1x1x128xf32>
    %23 = vector.broadcast %22 : vector<1x1x128xf32> to vector<8x16x128xf32>
    %24 = arith.mulf %19, %23 : vector<8x16x128xf32>
    %25 = arith.addf %16, %24 : vector<8x16x128xf32>
    %c0_i32_27 = arith.constant 0 : i32
    %26 = arith.addi %15, %c0_i32_27 : i32
    %27 = arith.index_cast %26 : i32 to index
    %c1_28 = arith.constant 1 : index
    %c0_29 = arith.constant 0 : index
    %28 = vector.load %arg5[%27, %c1_28, %c0_29] : memref<18x18x128xf32, #tpu.memory_space<vmem>>, vector<8x16x128xf32>
    %29 = vector.extract_strided_slice %11 {offsets = [1, 0], sizes = [1, 128], strides = [1, 1]} : vector<9x128xf32> to vector<1x128xf32>
    %30 = vector.shape_cast %29 : vector<1x128xf32> to vector<128xf32>
    %31 = vector.shape_cast %30 : vector<128xf32> to vector<1x1x128xf32>
    %32 = vector.broadcast %31 : vector<1x1x128xf32> to vector<8x16x128xf32>
    %33 = arith.mulf %28, %32 : vector<8x16x128xf32>
    %34 = arith.addf %25, %33 : vector<8x16x128xf32>
    %c0_i32_30 = arith.constant 0 : i32
    %35 = arith.addi %15, %c0_i32_30 : i32
    %36 = arith.index_cast %35 : i32 to index
    %c2 = arith.constant 2 : index
    %c0_31 = arith.constant 0 : index
    %37 = vector.load %arg5[%36, %c2, %c0_31] : memref<18x18x128xf32, #tpu.memory_space<vmem>>, vector<8x16x128xf32>
    %38 = vector.extract_strided_slice %11 {offsets = [2, 0], sizes = [1, 128], strides = [1, 1]} : vector<9x128xf32> to vector<1x128xf32>
    %39 = vector.shape_cast %38 : vector<1x128xf32> to vector<128xf32>
    %40 = vector.shape_cast %39 : vector<128xf32> to vector<1x1x128xf32>
    %41 = vector.broadcast %40 : vector<1x1x128xf32> to vector<8x16x128xf32>
    %42 = arith.mulf %37, %41 : vector<8x16x128xf32>
    %43 = arith.addf %34, %42 : vector<8x16x128xf32>
    %c1_i32 = arith.constant 1 : i32
    %44 = arith.addi %15, %c1_i32 : i32
    %45 = arith.index_cast %44 : i32 to index
    %c0_32 = arith.constant 0 : index
    %c0_33 = arith.constant 0 : index
    %46 = vector.load %arg5[%45, %c0_32, %c0_33] : memref<18x18x128xf32, #tpu.memory_space<vmem>>, vector<8x16x128xf32>
    %47 = vector.extract_strided_slice %11 {offsets = [3, 0], sizes = [1, 128], strides = [1, 1]} : vector<9x128xf32> to vector<1x128xf32>
    %48 = vector.shape_cast %47 : vector<1x128xf32> to vector<128xf32>
    %49 = vector.shape_cast %48 : vector<128xf32> to vector<1x1x128xf32>
    %50 = vector.broadcast %49 : vector<1x1x128xf32> to vector<8x16x128xf32>
    %51 = arith.mulf %46, %50 : vector<8x16x128xf32>
    %52 = arith.addf %43, %51 : vector<8x16x128xf32>
    %c1_i32_34 = arith.constant 1 : i32
    %53 = arith.addi %15, %c1_i32_34 : i32
    %54 = arith.index_cast %53 : i32 to index
    %c1_35 = arith.constant 1 : index
    %c0_36 = arith.constant 0 : index
    %55 = vector.load %arg5[%54, %c1_35, %c0_36] : memref<18x18x128xf32, #tpu.memory_space<vmem>>, vector<8x16x128xf32>
    %56 = vector.extract_strided_slice %11 {offsets = [4, 0], sizes = [1, 128], strides = [1, 1]} : vector<9x128xf32> to vector<1x128xf32>
    %57 = vector.shape_cast %56 : vector<1x128xf32> to vector<128xf32>
    %58 = vector.shape_cast %57 : vector<128xf32> to vector<1x1x128xf32>
    %59 = vector.broadcast %58 : vector<1x1x128xf32> to vector<8x16x128xf32>
    %60 = arith.mulf %55, %59 : vector<8x16x128xf32>
    %61 = arith.addf %52, %60 : vector<8x16x128xf32>
    %c1_i32_37 = arith.constant 1 : i32
    %62 = arith.addi %15, %c1_i32_37 : i32
    %63 = arith.index_cast %62 : i32 to index
    %c2_38 = arith.constant 2 : index
    %c0_39 = arith.constant 0 : index
    %64 = vector.load %arg5[%63, %c2_38, %c0_39] : memref<18x18x128xf32, #tpu.memory_space<vmem>>, vector<8x16x128xf32>
    %65 = vector.extract_strided_slice %11 {offsets = [5, 0], sizes = [1, 128], strides = [1, 1]} : vector<9x128xf32> to vector<1x128xf32>
    %66 = vector.shape_cast %65 : vector<1x128xf32> to vector<128xf32>
    %67 = vector.shape_cast %66 : vector<128xf32> to vector<1x1x128xf32>
    %68 = vector.broadcast %67 : vector<1x1x128xf32> to vector<8x16x128xf32>
    %69 = arith.mulf %64, %68 : vector<8x16x128xf32>
    %70 = arith.addf %61, %69 : vector<8x16x128xf32>
    %c2_i32 = arith.constant 2 : i32
    %71 = arith.addi %15, %c2_i32 : i32
    %72 = arith.index_cast %71 : i32 to index
    %c0_40 = arith.constant 0 : index
    %c0_41 = arith.constant 0 : index
    %73 = vector.load %arg5[%72, %c0_40, %c0_41] : memref<18x18x128xf32, #tpu.memory_space<vmem>>, vector<8x16x128xf32>
    %74 = vector.extract_strided_slice %11 {offsets = [6, 0], sizes = [1, 128], strides = [1, 1]} : vector<9x128xf32> to vector<1x128xf32>
    %75 = vector.shape_cast %74 : vector<1x128xf32> to vector<128xf32>
    %76 = vector.shape_cast %75 : vector<128xf32> to vector<1x1x128xf32>
    %77 = vector.broadcast %76 : vector<1x1x128xf32> to vector<8x16x128xf32>
    %78 = arith.mulf %73, %77 : vector<8x16x128xf32>
    %79 = arith.addf %70, %78 : vector<8x16x128xf32>
    %c2_i32_42 = arith.constant 2 : i32
    %80 = arith.addi %15, %c2_i32_42 : i32
    %81 = arith.index_cast %80 : i32 to index
    %c1_43 = arith.constant 1 : index
    %c0_44 = arith.constant 0 : index
    %82 = vector.load %arg5[%81, %c1_43, %c0_44] : memref<18x18x128xf32, #tpu.memory_space<vmem>>, vector<8x16x128xf32>
    %83 = vector.extract_strided_slice %11 {offsets = [7, 0], sizes = [1, 128], strides = [1, 1]} : vector<9x128xf32> to vector<1x128xf32>
    %84 = vector.shape_cast %83 : vector<1x128xf32> to vector<128xf32>
    %85 = vector.shape_cast %84 : vector<128xf32> to vector<1x1x128xf32>
    %86 = vector.broadcast %85 : vector<1x1x128xf32> to vector<8x16x128xf32>
    %87 = arith.mulf %82, %86 : vector<8x16x128xf32>
    %88 = arith.addf %79, %87 : vector<8x16x128xf32>
    %c2_i32_45 = arith.constant 2 : i32
    %89 = arith.addi %15, %c2_i32_45 : i32
    %90 = arith.index_cast %89 : i32 to index
    %c2_46 = arith.constant 2 : index
    %c0_47 = arith.constant 0 : index
    %91 = vector.load %arg5[%90, %c2_46, %c0_47] : memref<18x18x128xf32, #tpu.memory_space<vmem>>, vector<8x16x128xf32>
    %92 = vector.extract_strided_slice %11 {offsets = [8, 0], sizes = [1, 128], strides = [1, 1]} : vector<9x128xf32> to vector<1x128xf32>
    %93 = vector.shape_cast %92 : vector<1x128xf32> to vector<128xf32>
    %94 = vector.shape_cast %93 : vector<128xf32> to vector<1x1x128xf32>
    %95 = vector.broadcast %94 : vector<1x1x128xf32> to vector<8x16x128xf32>
    %96 = arith.mulf %91, %95 : vector<8x16x128xf32>
    %97 = arith.addf %88, %96 : vector<8x16x128xf32>
    %98 = vector.broadcast %13 : vector<1x1x128xf32> to vector<8x16x128xf32>
    %99 = arith.addf %97, %98 : vector<8x16x128xf32>
    %c0_48 = arith.constant 0 : index
    %100 = arith.index_cast %15 : i32 to index
    %c0_49 = arith.constant 0 : index
    %c0_50 = arith.constant 0 : index
    %101 = vector.load %arg4[%c0_48, %100, %c0_49, %c0_50] : memref<1x16x16x128xf32, #tpu.memory_space<vmem>>, vector<1x8x16x128xf32>
    %102 = vector.shape_cast %101 : vector<1x8x16x128xf32> to vector<8x16x128xf32>
    %103 = vector.shape_cast %99 : vector<8x16x128xf32> to vector<1x8x16x128xf32>
    tpu.vector_store %arg4[%c0_48, %100, %c0_49, %c0_50], %103 {strides = array<i32>} : memref<1x16x16x128xf32, #tpu.memory_space<vmem>>, vector<1x8x16x128xf32>,
    %c1_i32_51 = arith.constant 1 : i32
    %c8_i32_52 = arith.constant 8 : i32
    %104 = arith.muli %c1_i32_51, %c8_i32_52 : i32
    %105 = tpu.assume_multiple %104, 8 : i32
    %cst_53 = arith.constant 0.000000e+00 : f32
    %106 = vector.broadcast %cst_53 : f32 to vector<8x16x128xf32>
    %c0_i32_54 = arith.constant 0 : i32
    %107 = arith.addi %105, %c0_i32_54 : i32
    %108 = arith.index_cast %107 : i32 to index
    %c0_55 = arith.constant 0 : index
    %c0_56 = arith.constant 0 : index
    %109 = vector.load %arg5[%108, %c0_55, %c0_56] : memref<18x18x128xf32, #tpu.memory_space<vmem>>, vector<8x16x128xf32>
    %110 = vector.extract_strided_slice %11 {offsets = [0, 0], sizes = [1, 128], strides = [1, 1]} : vector<9x128xf32> to vector<1x128xf32>
    %111 = vector.shape_cast %110 : vector<1x128xf32> to vector<128xf32>
    %112 = vector.shape_cast %111 : vector<128xf32> to vector<1x1x128xf32>
    %113 = vector.broadcast %112 : vector<1x1x128xf32> to vector<8x16x128xf32>
    %114 = arith.mulf %109, %113 : vector<8x16x128xf32>
    %115 = arith.addf %106, %114 : vector<8x16x128xf32>
    %c0_i32_57 = arith.constant 0 : i32
    %116 = arith.addi %105, %c0_i32_57 : i32
    %117 = arith.index_cast %116 : i32 to index
    %c1_58 = arith.constant 1 : index
    %c0_59 = arith.constant 0 : index
    %118 = vector.load %arg5[%117, %c1_58, %c0_59] : memref<18x18x128xf32, #tpu.memory_space<vmem>>, vector<8x16x128xf32>
    %119 = vector.extract_strided_slice %11 {offsets = [1, 0], sizes = [1, 128], strides = [1, 1]} : vector<9x128xf32> to vector<1x128xf32>
    %120 = vector.shape_cast %119 : vector<1x128xf32> to vector<128xf32>
    %121 = vector.shape_cast %120 : vector<128xf32> to vector<1x1x128xf32>
    %122 = vector.broadcast %121 : vector<1x1x128xf32> to vector<8x16x128xf32>
    %123 = arith.mulf %118, %122 : vector<8x16x128xf32>
    %124 = arith.addf %115, %123 : vector<8x16x128xf32>
    %c0_i32_60 = arith.constant 0 : i32
    %125 = arith.addi %105, %c0_i32_60 : i32
    %126 = arith.index_cast %125 : i32 to index
    %c2_61 = arith.constant 2 : index
    %c0_62 = arith.constant 0 : index
    %127 = vector.load %arg5[%126, %c2_61, %c0_62] : memref<18x18x128xf32, #tpu.memory_space<vmem>>, vector<8x16x128xf32>
    %128 = vector.extract_strided_slice %11 {offsets = [2, 0], sizes = [1, 128], strides = [1, 1]} : vector<9x128xf32> to vector<1x128xf32>
    %129 = vector.shape_cast %128 : vector<1x128xf32> to vector<128xf32>
    %130 = vector.shape_cast %129 : vector<128xf32> to vector<1x1x128xf32>
    %131 = vector.broadcast %130 : vector<1x1x128xf32> to vector<8x16x128xf32>
    %132 = arith.mulf %127, %131 : vector<8x16x128xf32>
    %133 = arith.addf %124, %132 : vector<8x16x128xf32>
    %c1_i32_63 = arith.constant 1 : i32
    %134 = arith.addi %105, %c1_i32_63 : i32
    %135 = arith.index_cast %134 : i32 to index
    %c0_64 = arith.constant 0 : index
    %c0_65 = arith.constant 0 : index
    %136 = vector.load %arg5[%135, %c0_64, %c0_65] : memref<18x18x128xf32, #tpu.memory_space<vmem>>, vector<8x16x128xf32>
    %137 = vector.extract_strided_slice %11 {offsets = [3, 0], sizes = [1, 128], strides = [1, 1]} : vector<9x128xf32> to vector<1x128xf32>
    %138 = vector.shape_cast %137 : vector<1x128xf32> to vector<128xf32>
    %139 = vector.shape_cast %138 : vector<128xf32> to vector<1x1x128xf32>
    %140 = vector.broadcast %139 : vector<1x1x128xf32> to vector<8x16x128xf32>
    %141 = arith.mulf %136, %140 : vector<8x16x128xf32>
    %142 = arith.addf %133, %141 : vector<8x16x128xf32>
    %c1_i32_66 = arith.constant 1 : i32
    %143 = arith.addi %105, %c1_i32_66 : i32
    %144 = arith.index_cast %143 : i32 to index
    %c1_67 = arith.constant 1 : index
    %c0_68 = arith.constant 0 : index
    %145 = vector.load %arg5[%144, %c1_67, %c0_68] : memref<18x18x128xf32, #tpu.memory_space<vmem>>, vector<8x16x128xf32>
    %146 = vector.extract_strided_slice %11 {offsets = [4, 0], sizes = [1, 128], strides = [1, 1]} : vector<9x128xf32> to vector<1x128xf32>
    %147 = vector.shape_cast %146 : vector<1x128xf32> to vector<128xf32>
    %148 = vector.shape_cast %147 : vector<128xf32> to vector<1x1x128xf32>
    %149 = vector.broadcast %148 : vector<1x1x128xf32> to vector<8x16x128xf32>
    %150 = arith.mulf %145, %149 : vector<8x16x128xf32>
    %151 = arith.addf %142, %150 : vector<8x16x128xf32>
    %c1_i32_69 = arith.constant 1 : i32
    %152 = arith.addi %105, %c1_i32_69 : i32
    %153 = arith.index_cast %152 : i32 to index
    %c2_70 = arith.constant 2 : index
    %c0_71 = arith.constant 0 : index
    %154 = vector.load %arg5[%153, %c2_70, %c0_71] : memref<18x18x128xf32, #tpu.memory_space<vmem>>, vector<8x16x128xf32>
    %155 = vector.extract_strided_slice %11 {offsets = [5, 0], sizes = [1, 128], strides = [1, 1]} : vector<9x128xf32> to vector<1x128xf32>
    %156 = vector.shape_cast %155 : vector<1x128xf32> to vector<128xf32>
    %157 = vector.shape_cast %156 : vector<128xf32> to vector<1x1x128xf32>
    %158 = vector.broadcast %157 : vector<1x1x128xf32> to vector<8x16x128xf32>
    %159 = arith.mulf %154, %158 : vector<8x16x128xf32>
    %160 = arith.addf %151, %159 : vector<8x16x128xf32>
    %c2_i32_72 = arith.constant 2 : i32
    %161 = arith.addi %105, %c2_i32_72 : i32
    %162 = arith.index_cast %161 : i32 to index
    %c0_73 = arith.constant 0 : index
    %c0_74 = arith.constant 0 : index
    %163 = vector.load %arg5[%162, %c0_73, %c0_74] : memref<18x18x128xf32, #tpu.memory_space<vmem>>, vector<8x16x128xf32>
    %164 = vector.extract_strided_slice %11 {offsets = [6, 0], sizes = [1, 128], strides = [1, 1]} : vector<9x128xf32> to vector<1x128xf32>
    %165 = vector.shape_cast %164 : vector<1x128xf32> to vector<128xf32>
    %166 = vector.shape_cast %165 : vector<128xf32> to vector<1x1x128xf32>
    %167 = vector.broadcast %166 : vector<1x1x128xf32> to vector<8x16x128xf32>
    %168 = arith.mulf %163, %167 : vector<8x16x128xf32>
    %169 = arith.addf %160, %168 : vector<8x16x128xf32>
    %c2_i32_75 = arith.constant 2 : i32
    %170 = arith.addi %105, %c2_i32_75 : i32
    %171 = arith.index_cast %170 : i32 to index
    %c1_76 = arith.constant 1 : index
    %c0_77 = arith.constant 0 : index
    %172 = vector.load %arg5[%171, %c1_76, %c0_77] : memref<18x18x128xf32, #tpu.memory_space<vmem>>, vector<8x16x128xf32>
    %173 = vector.extract_strided_slice %11 {offsets = [7, 0], sizes = [1, 128], strides = [1, 1]} : vector<9x128xf32> to vector<1x128xf32>
    %174 = vector.shape_cast %173 : vector<1x128xf32> to vector<128xf32>
    %175 = vector.shape_cast %174 : vector<128xf32> to vector<1x1x128xf32>
    %176 = vector.broadcast %175 : vector<1x1x128xf32> to vector<8x16x128xf32>
    %177 = arith.mulf %172, %176 : vector<8x16x128xf32>
    %178 = arith.addf %169, %177 : vector<8x16x128xf32>
    %c2_i32_78 = arith.constant 2 : i32
    %179 = arith.addi %105, %c2_i32_78 : i32
    %180 = arith.index_cast %179 : i32 to index
    %c2_79 = arith.constant 2 : index
    %c0_80 = arith.constant 0 : index
    %181 = vector.load %arg5[%180, %c2_79, %c0_80] : memref<18x18x128xf32, #tpu.memory_space<vmem>>, vector<8x16x128xf32>
    %182 = vector.extract_strided_slice %11 {offsets = [8, 0], sizes = [1, 128], strides = [1, 1]} : vector<9x128xf32> to vector<1x128xf32>
    %183 = vector.shape_cast %182 : vector<1x128xf32> to vector<128xf32>
    %184 = vector.shape_cast %183 : vector<128xf32> to vector<1x1x128xf32>
    %185 = vector.broadcast %184 : vector<1x1x128xf32> to vector<8x16x128xf32>
    %186 = arith.mulf %181, %185 : vector<8x16x128xf32>
    %187 = arith.addf %178, %186 : vector<8x16x128xf32>
    %188 = vector.broadcast %13 : vector<1x1x128xf32> to vector<8x16x128xf32>
    %189 = arith.addf %187, %188 : vector<8x16x128xf32>
    %c0_81 = arith.constant 0 : index
    %190 = arith.index_cast %105 : i32 to index
    %c0_82 = arith.constant 0 : index
    %c0_83 = arith.constant 0 : index
    %191 = vector.load %arg4[%c0_81, %190, %c0_82, %c0_83] : memref<1x16x16x128xf32, #tpu.memory_space<vmem>>, vector<1x8x16x128xf32>
    %192 = vector.shape_cast %191 : vector<1x8x16x128xf32> to vector<8x16x128xf32>
    %193 = vector.shape_cast %189 : vector<8x16x128xf32> to vector<1x8x16x128xf32>
    tpu.vector_store %arg4[%c0_81, %190, %c0_82, %c0_83], %193 {strides = array<i32>} : memref<1x16x16x128xf32, #tpu.memory_space<vmem>>, vector<1x8x16x128xf32>,
    %c2_i32_84 = arith.constant 2 : i32
    return
  }
  func.func @transform_0(%arg0: i32) -> (i32, i32, i32, i32) {
    %c0_i32 = arith.constant 0 : i32
    %c0_i32_0 = arith.constant 0 : i32
    %c0_i32_1 = arith.constant 0 : i32
    %c0_i32_2 = arith.constant 0 : i32
    return %arg0, %c0_i32, %c0_i32_0, %c0_i32_1 : i32, i32, i32, i32
  }
  func.func @transform_1(%arg0: i32) -> (i32, i32) {
    %c0_i32 = arith.constant 0 : i32
    %c0_i32_0 = arith.constant 0 : i32
    %c0_i32_1 = arith.constant 0 : i32
    return %c0_i32, %c0_i32_0 : i32, i32
  }
  func.func @transform_2(%arg0: i32) -> (i32, i32) {
    %c0_i32 = arith.constant 0 : i32
    %c0_i32_0 = arith.constant 0 : i32
    %c0_i32_1 = arith.constant 0 : i32
    return %c0_i32, %c0_i32_0 : i32, i32
  }
  func.func @transform_3(%arg0: i32) -> (i32, i32, i32, i32) {
    %c0_i32 = arith.constant 0 : i32
    %c0_i32_0 = arith.constant 0 : i32
    %c0_i32_1 = arith.constant 0 : i32
    %c0_i32_2 = arith.constant 0 : i32
    return %arg0, %c0_i32, %c0_i32_0, %c0_i32_1 : i32, i32, i32, i32
  }
}

</mosaic_0001>

<llo_original>
// kernel: tpu_custom_call.1
$region0: #{tpu_custom_call.1}
  #allocation0 [shape = 'u32[]', space=smem, size = 0x4, offset = 0x4, fixed_abs, tag = 'smem constant byte address 0x4 - core index']
  #allocation1 [shape = 'u32[144,128]{1,0:T(1,128)}', space=vmem, size = 0x12000, scoped, tag = 'internal scratch']
  #allocation2 [shape = 'f32[18,18,128]{2,1,0:T(8,128)}', space=vmem, size = 0x36000, scoped, tag = 'scratch operand']
  %s0 = inlined_call_operand.hbm [shape: f32[2,16,16,128], index: 0, kind: input, shape index: {}]
  %s1 = inlined_call_operand.hbm [shape: f32[9,128], index: 1, kind: input, shape index: {}]
  %s2 = inlined_call_operand.vmem [shape: f32[1,128], index: 2, kind: input, shape index: {}]
  %s3 = inlined_call_operand.hbm [shape: f32[2,16,16,128], index: 3, kind: output, shape index: {}]
  %s4 = sld [smem:[#allocation0]]
  $region53: #{tpu_custom_call.1} parent=0
    _
  %s6 = ssub.s32 1, %s4
  %s7 = scalar_select 0, %s6, %s4
  $region1: #{tpu_custom_call.1} parent=0
    #allocation3 [shape = 'u8[262144]{0}', space=vmem, size = 0x40000, scoped, tag = 'input window, operand 0']
    #allocation4 [shape = 's32[2]{0}', space=sflag, size = 0x8, scoped, tag = 'scoped memory for tpu_custom_call.1']
    #allocation5 [shape = 's32[2]{0}', space=sflag, size = 0x8, scoped, tag = 'scoped memory for tpu_custom_call.1']
    #allocation6 [shape = 'u8[8192]{0}', space=vmem, size = 0x2000, scoped, tag = 'input window, operand 1, single buffered']
    #allocation7 [shape = 's32[1]{0}', space=sflag, size = 0x4, scoped, tag = 'scoped memory for tpu_custom_call.1']
    #allocation8 [shape = 'u8[262144]{0}', space=vmem, size = 0x40000, scoped, tag = 'output window, operand 0']
    %8 = vsyncpa [#allocation4], 0
    %s9 = scalar_lea.sflag [#allocation4], 1
    %10 = vsyncpa %s9, 0
    %11 = vsyncpa [#allocation7], 0
    %12 = vsyncpa [#allocation5], 0
    %s13 = scalar_lea.sflag [#allocation5], 1
    %14 = vsyncpa %s13, 0
    loop: start=0, step=1, limit=4
    $region2: #{tpu_custom_call.1} parent=1 // loop_pre_header
      _
    $region3: #{tpu_custom_call.1} parent=1 // loop_header
      %s16 = sphi 0, %s20
      %p17 = scmp.ge.s32.totalorder %s16, 4
      %s26 = sphi 0, %s28
      %s29 = sphi 0, %s26
      %s30 = sphi 0, %s29
      %s46 = sphi 0, %s30
      %s50 = sphi 0, %s50
      %s52 = sphi 0, %s50
      %s53 = sphi 0, %s52
      %s67 = sphi 0, %s53
      %s71 = sphi 0, %s71
      %s73 = sphi 0, %s71
      %s74 = sphi 0, %s73
      %s88 = sphi 0, %s74
      %s94 = sphi 0, %s96
      %s97 = sphi 0, %s94
      %s98 = sphi 0, %s97
      %s114 = sphi 0, %s98
    $region4: #{tpu_custom_call.1} parent=1 // loop_header_branch
      %19 = sbr.rel (%p17) target = $region8
    $region5: #{tpu_custom_call.1} parent=1 // loop_body
      %s21 = ssub.s32 %s16, 1
      %s22 = ssub.s32 %s16, 2
      %s23 = sadd.s32 %s16, 1
      %s24 = ssub.s32 %s16, %s23
      %p25 = scmp.eq.s32.totalorder %s24, 0
      %s27 = sadd.s32 %s26, 1
      %s28 = scalar_select %p25, %s26, %s27
      %p31 = pneg %p25
      %p32 = scmp.eq.s32.totalorder %s16, 1
      %p33 = por %p31, %p32
      %p34 = scmp.ne.s32.totalorder %s26, %s29
      %p35 = scmp.eq.s32.totalorder %s16, 0
      %p36 = por %p34, %p35
      %p37 = scmp.ne.s32.totalorder %s26, %s29
      %p38 = scmp.eq.s32.totalorder %s21, 1
      %p39 = por %p37, %p38
      %p40 = scmp.ne.s32.totalorder %s29, %s30
      %p41 = scmp.eq.s32.totalorder %s21, 0
      %p42 = por %p40, %p41
      %p43 = scmp.ne.s32.totalorder %s29, %s30
      %p44 = scmp.eq.s32.totalorder %s22, 1
      %p45 = por %p43, %p44
      %p47 = scmp.ne.s32.totalorder %s30, %s46
      %p48 = scmp.eq.s32.totalorder %s22, 0
      %p49 = por %p47, %p48
      %s51 = sadd.s32 %s50, 1
      %p54 = scmp.eq.s32.totalorder %s16, 1
      %p55 = scmp.ne.s32.totalorder %s50, %s52
      %p56 = scmp.eq.s32.totalorder %s16, 0
      %p57 = por %p55, %p56
      %p58 = scmp.ne.s32.totalorder %s50, %s52
      %p59 = scmp.eq.s32.totalorder %s21, 1
      %p60 = por %p58, %p59
      %p61 = scmp.ne.s32.totalorder %s52, %s53
      %p62 = scmp.eq.s32.totalorder %s21, 0
      %p63 = por %p61, %p62
      %p64 = scmp.ne.s32.totalorder %s52, %s53
      %p65 = scmp.eq.s32.totalorder %s22, 1
      %p66 = por %p64, %p65
      %p68 = scmp.ne.s32.totalorder %s53, %s67
      %p69 = scmp.eq.s32.totalorder %s22, 0
      %p70 = por %p68, %p69
      %s72 = sadd.s32 %s71, 1
      %p75 = scmp.eq.s32.totalorder %s16, 1
      %p76 = scmp.ne.s32.totalorder %s71, %s73
      %p77 = scmp.eq.s32.totalorder %s16, 0
      %p78 = por %p76, %p77
      %p79 = scmp.ne.s32.totalorder %s71, %s73
      %p80 = scmp.eq.s32.totalorder %s21, 1
      %p81 = por %p79, %p80
      %p82 = scmp.ne.s32.totalorder %s73, %s74
      %p83 = scmp.eq.s32.totalorder %s21, 0
      %p84 = por %p82, %p83
      %p85 = scmp.ne.s32.totalorder %s73, %s74
      %p86 = scmp.eq.s32.totalorder %s22, 1
      %p87 = por %p85, %p86
      %p89 = scmp.ne.s32.totalorder %s74, %s88
      %p90 = scmp.eq.s32.totalorder %s22, 0
      %p91 = por %p89, %p90
      %s92 = ssub.s32 %s16, %s23
      %p93 = scmp.eq.s32.totalorder %s92, 0
      %s95 = sadd.s32 %s94, 1
      %s96 = scalar_select %p93, %s94, %s95
      %p99 = pneg %p93
      %p100 = scmp.eq.s32.totalorder %s16, 1
      %p101 = por %p99, %p100
      %p102 = scmp.ne.s32.totalorder %s94, %s97
      %p103 = scmp.eq.s32.totalorder %s16, 0
      %p104 = por %p102, %p103
      %p105 = scmp.ne.s32.totalorder %s94, %s97
      %p106 = scmp.eq.s32.totalorder %s21, 1
      %p107 = por %p105, %p106
      %p108 = scmp.ne.s32.totalorder %s97, %s98
      %p109 = scmp.eq.s32.totalorder %s21, 0
      %p110 = por %p108, %p109
      %p111 = scmp.ne.s32.totalorder %s97, %s98
      %p112 = scmp.eq.s32.totalorder %s22, 1
      %p113 = por %p111, %p112
      %p115 = scmp.ne.s32.totalorder %s98, %s114
      %p116 = scmp.eq.s32.totalorder %s22, 0
      %p117 = por %p115, %p116
      %p118 = scmp.le.s32.totalorder 1, %s16
      %p119 = scmp.lt.s32.totalorder %s16, 3
      %p120 = pnand %p118, %p119
      %p121 = pneg %p120
      // Predicated region
      $region9: #{tpu_custom_call.1} parent=5 // pred_check
        _
      $region10: #{tpu_custom_call.1} parent=5 // pred_check_branch
        %123 = sbr.rel (%p120) target = $region12
      $region11: #{tpu_custom_call.1} parent=5 // pred_region
        %s124 = ssub.s32 %s16, 1
        // Predicated region
        $region13: #{tpu_custom_call.1} parent=11 // pred_check
          %p125 = pneg %p63
        $region14: #{tpu_custom_call.1} parent=11 // pred_check_branch
          %127 = sbr.rel (%p125) target = $region16
        $region15: #{tpu_custom_call.1} parent=11 // pred_region
          %s129 = ssub.s32 256, 256
          %130 = vsyncadd [#allocation7], %s129
          %s131 = sshll.u32 [#allocation6], 4
          %s132 = int_to_ptr.vmem [resolvable:$true] %s131
          %137 = dma.hbm_to_vmem [thread:$0]  %s1, 256, %s132, [#allocation7], 128, 128, 8
        $region16: #{tpu_custom_call.1} parent=11 // pred_fallthru
          _
        // Predicated region
        $region17: #{tpu_custom_call.1} parent=11 // pred_check
          %p138 = pneg %p84
        $region18: #{tpu_custom_call.1} parent=11 // pred_check_branch
          %140 = sbr.rel (%p138) target = $region20
        $region19: #{tpu_custom_call.1} parent=11 // pred_region
          _
        $region20: #{tpu_custom_call.1} parent=11 // pred_fallthru
          _
      $region12: #{tpu_custom_call.1} parent=5 // pred_fallthru
        _
      %p141 = scmp.lt.s32.totalorder %s16, 2
      // Predicated region
      $region21: #{tpu_custom_call.1} parent=5 // pred_check
        %p142 = pneg %p141
      $region22: #{tpu_custom_call.1} parent=5 // pred_check_branch
        %144 = sbr.rel (%p142) target = $region24
      $region23: #{tpu_custom_call.1} parent=5 // pred_region
        // Predicated region
        $region25: #{tpu_custom_call.1} parent=23 // pred_check
          %p145 = pneg %p36
        $region26: #{tpu_custom_call.1} parent=23 // pred_check_branch
          %147 = sbr.rel (%p145) target = $region28
        $region27: #{tpu_custom_call.1} parent=23 // pred_region
          %s148 = sand.u32 %s26, 1
          %s149 = scalar_lea.sflag [#allocation4], %s148
          %s150 = sand.u32 %s26, 1
          %s151 = smul.addr %s150, 256
          %s152 = scalar_lea.vmem [#allocation3], %s151
          %s154 = ssub.s32 4096, 4096
          %155 = vsyncadd %s149, %s154
          %s156 = smul.addr %s16, 32
          %s157 = smul.addr %s156, 128
          %s158 = scalar_lea.hbm %s0, %s157
          %s159 = sshll.u32 %s152, 4
          %s160 = int_to_ptr.vmem [resolvable:$true] %s159
          %165 = dma.hbm_to_vmem [thread:$0]  %s158, 4096, %s160, %s149, 128, 128, 8
        $region28: #{tpu_custom_call.1} parent=23 // pred_fallthru
          _
      $region24: #{tpu_custom_call.1} parent=5 // pred_fallthru
        _
      %p166 = scmp.le.s32.totalorder 1, %s16
      %p167 = scmp.lt.s32.totalorder %s16, 3
      %p168 = pnand %p166, %p167
      %p169 = pneg %p168
      // Predicated region
      $region29: #{tpu_custom_call.1} parent=5 // pred_check
        _
      $region30: #{tpu_custom_call.1} parent=5 // pred_check_branch
        %171 = sbr.rel (%p168) target = $region32
      $region31: #{tpu_custom_call.1} parent=5 // pred_region
        %s172 = ssub.s32 %s16, 1
        %s173 = sand.u32 %s29, 1
        %s174 = scalar_lea.sflag [#allocation4], %s173
        %s175 = sand.u32 %s29, 1
        %s176 = smul.addr %s175, 256
        %s177 = scalar_lea.vmem [#allocation3], %s176
        // Predicated region
        $region33: #{tpu_custom_call.1} parent=31 // pred_check
          %p178 = pneg %p42
        $region34: #{tpu_custom_call.1} parent=31 // pred_check_branch
          %180 = sbr.rel (%p178) target = $region36
        $region35: #{tpu_custom_call.1} parent=31 // pred_region
          %181 = dma.done %s174, 4096
        $region36: #{tpu_custom_call.1} parent=31 // pred_fallthru
          _
        // Predicated region
        $region37: #{tpu_custom_call.1} parent=31 // pred_check
          %p182 = pneg %p63
        $region38: #{tpu_custom_call.1} parent=31 // pred_check_branch
          %184 = sbr.rel (%p182) target = $region40
        $region39: #{tpu_custom_call.1} parent=31 // pred_region
          %185 = dma.done [#allocation7], 256
        $region40: #{tpu_custom_call.1} parent=31 // pred_fallthru
          _
        %s186 = sand.u32 %s29, 1
        %s187 = scalar_lea.sflag [#allocation4], %s186
        %s188 = sand.u32 %s29, 1
        %s189 = smul.addr %s188, 256
        %s190 = scalar_lea.vmem [#allocation3], %s189
        %p191 = pneg %p42
        %p192 = pneg %p39
        %p193 = pneg %p63
        %p194 = pneg %p60
        %p195 = pneg %p84
        %p196 = pneg %p81
        %p197 = pneg %p110
        %p198 = pneg %p107
        %s199 = sand.u32 %s97, 1
        %s200 = scalar_lea.sflag [#allocation5], %s199
        %s201 = sand.u32 %s97, 1
        %s202 = smul.addr %s201, 256
        %s203 = scalar_lea.vmem [#allocation8], %s202
        %204 = vst [vmem:[#allocation2] sm:$0xff] 0.0
        %205 = vst [vmem:[#allocation2 + $0x8] sm:$0xff] 0.0
        %206 = vst [vmem:[#allocation2 + $0x10] sm:$0x3] 0.0
        %s207 = scalar_lea.vmem [#allocation2], 408
        %208 = vst [vmem:[%s207] sm:$0xff] 0.0
        %209 = vst [vmem:[%s207 + $0x8] sm:$0xff] 0.0
        %210 = vst [vmem:[%s207 + $0x10] sm:$0x3] 0.0
        %211 = vst [vmem:[#allocation2] sm:$0x1] 0.0
        %212 = vst [vmem:[#allocation2 + $0x18] sm:$0x1] 0.0
        %213 = vst [vmem:[#allocation2 + $0x30] sm:$0x1] 0.0
        %214 = vst [vmem:[#allocation2 + $0x48] sm:$0x1] 0.0
        %215 = vst [vmem:[#allocation2 + $0x60] sm:$0x1] 0.0
        %216 = vst [vmem:[#allocation2 + $0x78] sm:$0x1] 0.0
        %217 = vst [vmem:[#allocation2 + $0x90] sm:$0x1] 0.0
        %218 = vst [vmem:[#allocation2 + $0xa8] sm:$0x1] 0.0
        %219 = vst [vmem:[#allocation2 + $0xc0] sm:$0x1] 0.0
        %220 = vst [vmem:[#allocation2 + $0xd8] sm:$0x1] 0.0
        %221 = vst [vmem:[#allocation2 + $0xf0] sm:$0x1] 0.0
        %222 = vst [vmem:[#allocation2 + $0x108] sm:$0x1] 0.0
        %223 = vst [vmem:[#allocation2 + $0x120] sm:$0x1] 0.0
        %224 = vst [vmem:[#allocation2 + $0x138] sm:$0x1] 0.0
        %225 = vst [vmem:[#allocation2 + $0x150] sm:$0x1] 0.0
        %226 = vst [vmem:[#allocation2 + $0x168] sm:$0x1] 0.0
        %227 = vst [vmem:[#allocation2 + $0x180] sm:$0x1] 0.0
        %228 = vst [vmem:[#allocation2 + $0x198] sm:$0x1] 0.0
        %229 = vst [vmem:[#allocation2 + $0x11] sm:$0x1] 0.0
        %230 = vst [vmem:[#allocation2 + $0x29] sm:$0x1] 0.0
        %231 = vst [vmem:[#allocation2 + $0x41] sm:$0x1] 0.0
        %232 = vst [vmem:[#allocation2 + $0x59] sm:$0x1] 0.0
        %233 = vst [vmem:[#allocation2 + $0x71] sm:$0x1] 0.0
        %234 = vst [vmem:[#allocation2 + $0x89] sm:$0x1] 0.0
        %235 = vst [vmem:[#allocation2 + $0xa1] sm:$0x1] 0.0
        %236 = vst [vmem:[#allocation2 + $0xb9] sm:$0x1] 0.0
        %237 = vst [vmem:[#allocation2 + $0xd1] sm:$0x1] 0.0
        %238 = vst [vmem:[#allocation2 + $0xe9] sm:$0x1] 0.0
        %239 = vst [vmem:[#allocation2 + $0x101] sm:$0x1] 0.0
        %240 = vst [vmem:[#allocation2 + $0x119] sm:$0x1] 0.0
        %241 = vst [vmem:[#allocation2 + $0x131] sm:$0x1] 0.0
        %242 = vst [vmem:[#allocation2 + $0x149] sm:$0x1] 0.0
        %243 = vst [vmem:[#allocation2 + $0x161] sm:$0x1] 0.0
        %244 = vst [vmem:[#allocation2 + $0x179] sm:$0x1] 0.0
        %245 = vst [vmem:[#allocation2 + $0x191] sm:$0x1] 0.0
        %246 = vst [vmem:[#allocation2 + $0x1a9] sm:$0x1] 0.0
        %v247 = vld [vmem:[%s177] sm:$0xff]
        %v248 = vld [vmem:[%s177 + $0x8] sm:$0xff]
        %v249 = vld [vmem:[%s177 + $0x10] sm:$0xff]
        %v250 = vld [vmem:[%s177 + $0x18] sm:$0xff]
        %v251 = vld [vmem:[%s177 + $0x20] sm:$0xff]
        %v252 = vld [vmem:[%s177 + $0x28] sm:$0xff]
        %v253 = vld [vmem:[%s177 + $0x30] sm:$0xff]
        %v254 = vld [vmem:[%s177 + $0x38] sm:$0xff]
        %v255 = vld [vmem:[%s177 + $0x40] sm:$0xff]
        %v256 = vld [vmem:[%s177 + $0x48] sm:$0xff]
        %v257 = vld [vmem:[%s177 + $0x50] sm:$0xff]
        %v258 = vld [vmem:[%s177 + $0x58] sm:$0xff]
        %v259 = vld [vmem:[%s177 + $0x60] sm:$0xff]
        %v260 = vld [vmem:[%s177 + $0x68] sm:$0xff]
        %v261 = vld [vmem:[%s177 + $0x70] sm:$0xff]
        %v262 = vld [vmem:[%s177 + $0x78] sm:$0xff]
        %v263 = vld [vmem:[%s177 + $0x80] sm:$0xff]
        %v264 = vld [vmem:[%s177 + $0x88] sm:$0xff]
        %v265 = vld [vmem:[%s177 + $0x90] sm:$0xff]
        %v266 = vld [vmem:[%s177 + $0x98] sm:$0xff]
        %v267 = vld [vmem:[%s177 + $0xa0] sm:$0xff]
        %v268 = vld [vmem:[%s177 + $0xa8] sm:$0xff]
        %v269 = vld [vmem:[%s177 + $0xb0] sm:$0xff]
        %v270 = vld [vmem:[%s177 + $0xb8] sm:$0xff]
        %v271 = vld [vmem:[%s177 + $0xc0] sm:$0xff]
        %v272 = vld [vmem:[%s177 + $0xc8] sm:$0xff]
        %v273 = vld [vmem:[%s177 + $0xd0] sm:$0xff]
        %v274 = vld [vmem:[%s177 + $0xd8] sm:$0xff]
        %v275 = vld [vmem:[%s177 + $0xe0] sm:$0xff]
        %v276 = vld [vmem:[%s177 + $0xe8] sm:$0xff]
        %v277 = vld [vmem:[%s177 + $0xf0] sm:$0xff]
        %v278 = vld [vmem:[%s177 + $0xf8] sm:$0xff]
        %s279 = scalar_lea.vmem [#allocation2], 24
        %280 = vst [vmem:[%s279 + $0x1] sm:$0xff] %v247
        %281 = vst [vmem:[%s279 + $0x9] sm:$0xff] %v248
        %282 = vst [vmem:[%s279 + $0x19] sm:$0xff] %v249
        %283 = vst [vmem:[%s279 + $0x21] sm:$0xff] %v250
        %284 = vst [vmem:[%s279 + $0x31] sm:$0xff] %v251
        %285 = vst [vmem:[%s279 + $0x39] sm:$0xff] %v252
        %286 = vst [vmem:[%s279 + $0x49] sm:$0xff] %v253
        %287 = vst [vmem:[%s279 + $0x51] sm:$0xff] %v254
        %288 = vst [vmem:[%s279 + $0x61] sm:$0xff] %v255
        %289 = vst [vmem:[%s279 + $0x69] sm:$0xff] %v256
        %290 = vst [vmem:[%s279 + $0x79] sm:$0xff] %v257
        %291 = vst [vmem:[%s279 + $0x81] sm:$0xff] %v258
        %292 = vst [vmem:[%s279 + $0x91] sm:$0xff] %v259
        %293 = vst [vmem:[%s279 + $0x99] sm:$0xff] %v260
        %294 = vst [vmem:[%s279 + $0xa9] sm:$0xff] %v261
        %295 = vst [vmem:[%s279 + $0xb1] sm:$0xff] %v262
        %296 = vst [vmem:[%s279 + $0xc1] sm:$0xff] %v263
        %297 = vst [vmem:[%s279 + $0xc9] sm:$0xff] %v264
        %298 = vst [vmem:[%s279 + $0xd9] sm:$0xff] %v265
        %299 = vst [vmem:[%s279 + $0xe1] sm:$0xff] %v266
        %300 = vst [vmem:[%s279 + $0xf1] sm:$0xff] %v267
        %301 = vst [vmem:[%s279 + $0xf9] sm:$0xff] %v268
        %302 = vst [vmem:[%s279 + $0x109] sm:$0xff] %v269
        %303 = vst [vmem:[%s279 + $0x111] sm:$0xff] %v270
        %304 = vst [vmem:[%s279 + $0x121] sm:$0xff] %v271
        %305 = vst [vmem:[%s279 + $0x129] sm:$0xff] %v272
        %306 = vst [vmem:[%s279 + $0x139] sm:$0xff] %v273
        %307 = vst [vmem:[%s279 + $0x141] sm:$0xff] %v274
        %308 = vst [vmem:[%s279 + $0x151] sm:$0xff] %v275
        %309 = vst [vmem:[%s279 + $0x159] sm:$0xff] %v276
        %310 = vst [vmem:[%s279 + $0x169] sm:$0xff] %v277
        %311 = vst [vmem:[%s279 + $0x171] sm:$0xff] %v278
        %v312 = vld [vmem:[#allocation6] sm:$0xff]
        %v313 = vld [vmem:[#allocation6 + $0x8] sm:$0x1]
        %v314 = vld [vmem:[%s2] sm:$0x1]
        %s315 = smul.u32 0, 24
        %s316 = scalar_lea.vmem [#allocation2], %s315
        %v317 = vld [vmem:[%s316] sm:$0xff]
        %v318 = vld [vmem:[%s316 + $0x8] sm:$0xff]
        %v319 = vld [vmem:[%s316 + $0x18] sm:$0xff]
        %v320 = vld [vmem:[%s316 + $0x20] sm:$0xff]
        %v321 = vld [vmem:[%s316 + $0x30] sm:$0xff]
        %v322 = vld [vmem:[%s316 + $0x38] sm:$0xff]
        %v323 = vld [vmem:[%s316 + $0x48] sm:$0xff]
        %v324 = vld [vmem:[%s316 + $0x50] sm:$0xff]
        %v325 = vld [vmem:[%s316 + $0x60] sm:$0xff]
        %v326 = vld [vmem:[%s316 + $0x68] sm:$0xff]
        %v327 = vld [vmem:[%s316 + $0x78] sm:$0xff]
        %v328 = vld [vmem:[%s316 + $0x80] sm:$0xff]
        %v329 = vld [vmem:[%s316 + $0x90] sm:$0xff]
        %v330 = vld [vmem:[%s316 + $0x98] sm:$0xff]
        %v331 = vld [vmem:[%s316 + $0xa8] sm:$0xff]
        %v332 = vld [vmem:[%s316 + $0xb0] sm:$0xff]
        %v333 = vlaneseq
        %v334 = vshrl.u32 %v333, 7
        %v335 = vsub.s32 0, %v334
        %v336 = vrot.slane %v312, %v335
        %v337 = vmul.f32 %v317, %v336
        %v338 = vmul.f32 %v318, %v336
        %v339 = vmul.f32 %v319, %v336
        %v340 = vmul.f32 %v320, %v336
        %v341 = vmul.f32 %v321, %v336
        %v342 = vmul.f32 %v322, %v336
        %v343 = vmul.f32 %v323, %v336
        %v344 = vmul.f32 %v324, %v336
        %v345 = vmul.f32 %v325, %v336
        %v346 = vmul.f32 %v326, %v336
        %v347 = vmul.f32 %v327, %v336
        %v348 = vmul.f32 %v328, %v336
        %v349 = vmul.f32 %v329, %v336
        %v350 = vmul.f32 %v330, %v336
        %v351 = vmul.f32 %v331, %v336
        %v352 = vmul.f32 %v332, %v336
        %v353 = vadd.f32 %v337, 0.0
        %v354 = vadd.f32 %v338, 0.0
        %v355 = vadd.f32 %v339, 0.0
        %v356 = vadd.f32 %v340, 0.0
        %v357 = vadd.f32 %v341, 0.0
        %v358 = vadd.f32 %v342, 0.0
        %v359 = vadd.f32 %v343, 0.0
        %v360 = vadd.f32 %v344, 0.0
        %v361 = vadd.f32 %v345, 0.0
        %v362 = vadd.f32 %v346, 0.0
        %v363 = vadd.f32 %v347, 0.0
        %v364 = vadd.f32 %v348, 0.0
        %v365 = vadd.f32 %v349, 0.0
        %v366 = vadd.f32 %v350, 0.0
        %v367 = vadd.f32 %v351, 0.0
        %v368 = vadd.f32 %v352, 0.0
        %v369 = vld [vmem:[%s316 + $0x1] sm:$0xff]
        %v370 = vld [vmem:[%s316 + $0x9] sm:$0xff]
        %v371 = vld [vmem:[%s316 + $0x19] sm:$0xff]
        %v372 = vld [vmem:[%s316 + $0x21] sm:$0xff]
        %v373 = vld [vmem:[%s316 + $0x31] sm:$0xff]
        %v374 = vld [vmem:[%s316 + $0x39] sm:$0xff]
        %v375 = vld [vmem:[%s316 + $0x49] sm:$0xff]
        %v376 = vld [vmem:[%s316 + $0x51] sm:$0xff]
        %v377 = vld [vmem:[%s316 + $0x61] sm:$0xff]
        %v378 = vld [vmem:[%s316 + $0x69] sm:$0xff]
        %v379 = vld [vmem:[%s316 + $0x79] sm:$0xff]
        %v380 = vld [vmem:[%s316 + $0x81] sm:$0xff]
        %v381 = vld [vmem:[%s316 + $0x91] sm:$0xff]
        %v382 = vld [vmem:[%s316 + $0x99] sm:$0xff]
        %v383 = vld [vmem:[%s316 + $0xa9] sm:$0xff]
        %v384 = vld [vmem:[%s316 + $0xb1] sm:$0xff]
        %v385 = vlaneseq
        %v386 = vshrl.u32 %v385, 7
        %v387 = vsub.s32 1, %v386
        %v388 = vrot.slane %v312, %v387
        %v389 = vmul.f32 %v369, %v388
        %v390 = vmul.f32 %v370, %v388
        %v391 = vmul.f32 %v371, %v388
        %v392 = vmul.f32 %v372, %v388
        %v393 = vmul.f32 %v373, %v388
        %v394 = vmul.f32 %v374, %v388
        %v395 = vmul.f32 %v375, %v388
        %v396 = vmul.f32 %v376, %v388
        %v397 = vmul.f32 %v377, %v388
        %v398 = vmul.f32 %v378, %v388
        %v399 = vmul.f32 %v379, %v388
        %v400 = vmul.f32 %v380, %v388
        %v401 = vmul.f32 %v381, %v388
        %v402 = vmul.f32 %v382, %v388
        %v403 = vmul.f32 %v383, %v388
        %v404 = vmul.f32 %v384, %v388
        %v405 = vadd.f32 %v353, %v389
        %v406 = vadd.f32 %v354, %v390
        %v407 = vadd.f32 %v355, %v391
        %v408 = vadd.f32 %v356, %v392
        %v409 = vadd.f32 %v357, %v393
        %v410 = vadd.f32 %v358, %v394
        %v411 = vadd.f32 %v359, %v395
        %v412 = vadd.f32 %v360, %v396
        %v413 = vadd.f32 %v361, %v397
        %v414 = vadd.f32 %v362, %v398
        %v415 = vadd.f32 %v363, %v399
        %v416 = vadd.f32 %v364, %v400
        %v417 = vadd.f32 %v365, %v401
        %v418 = vadd.f32 %v366, %v402
        %v419 = vadd.f32 %v367, %v403
        %v420 = vadd.f32 %v368, %v404
        %v421 = vld [vmem:[%s316 + $0x2] sm:$0xff]
        %v422 = vld [vmem:[%s316 + $0xa] sm:$0xff]
        %v423 = vld [vmem:[%s316 + $0x1a] sm:$0xff]
        %v424 = vld [vmem:[%s316 + $0x22] sm:$0xff]
        %v425 = vld [vmem:[%s316 + $0x32] sm:$0xff]
        %v426 = vld [vmem:[%s316 + $0x3a] sm:$0xff]
        %v427 = vld [vmem:[%s316 + $0x4a] sm:$0xff]
        %v428 = vld [vmem:[%s316 + $0x52] sm:$0xff]
        %v429 = vld [vmem:[%s316 + $0x62] sm:$0xff]
        %v430 = vld [vmem:[%s316 + $0x6a] sm:$0xff]
        %v431 = vld [vmem:[%s316 + $0x7a] sm:$0xff]
        %v432 = vld [vmem:[%s316 + $0x82] sm:$0xff]
        %v433 = vld [vmem:[%s316 + $0x92] sm:$0xff]
        %v434 = vld [vmem:[%s316 + $0x9a] sm:$0xff]
        %v435 = vld [vmem:[%s316 + $0xaa] sm:$0xff]
        %v436 = vld [vmem:[%s316 + $0xb2] sm:$0xff]
        %v437 = vlaneseq
        %v438 = vshrl.u32 %v437, 7
        %v439 = vsub.s32 2, %v438
        %v440 = vrot.slane %v312, %v439
        %v441 = vmul.f32 %v421, %v440
        %v442 = vmul.f32 %v422, %v440
        %v443 = vmul.f32 %v423, %v440
        %v444 = vmul.f32 %v424, %v440
        %v445 = vmul.f32 %v425, %v440
        %v446 = vmul.f32 %v426, %v440
        %v447 = vmul.f32 %v427, %v440
        %v448 = vmul.f32 %v428, %v440
        %v449 = vmul.f32 %v429, %v440
        %v450 = vmul.f32 %v430, %v440
        %v451 = vmul.f32 %v431, %v440
        %v452 = vmul.f32 %v432, %v440
        %v453 = vmul.f32 %v433, %v440
        %v454 = vmul.f32 %v434, %v440
        %v455 = vmul.f32 %v435, %v440
        %v456 = vmul.f32 %v436, %v440
        %v457 = vadd.f32 %v405, %v441
        %v458 = vadd.f32 %v406, %v442
        %v459 = vadd.f32 %v407, %v443
        %v460 = vadd.f32 %v408, %v444
        %v461 = vadd.f32 %v409, %v445
        %v462 = vadd.f32 %v410, %v446
        %v463 = vadd.f32 %v411, %v447
        %v464 = vadd.f32 %v412, %v448
        %v465 = vadd.f32 %v413, %v449
        %v466 = vadd.f32 %v414, %v450
        %v467 = vadd.f32 %v415, %v451
        %v468 = vadd.f32 %v416, %v452
        %v469 = vadd.f32 %v417, %v453
        %v470 = vadd.f32 %v418, %v454
        %v471 = vadd.f32 %v419, %v455
        %v472 = vadd.f32 %v420, %v456
        %s473 = sadd.s32 0, 1
        %s474 = smul.u32 %s473, 24
        %s475 = scalar_lea.vmem [#allocation2], %s474
        %v476 = vld [vmem:[%s475] sm:$0xff]
        %v477 = vld [vmem:[%s475 + $0x8] sm:$0xff]
        %v478 = vld [vmem:[%s475 + $0x18] sm:$0xff]
        %v479 = vld [vmem:[%s475 + $0x20] sm:$0xff]
        %v480 = vld [vmem:[%s475 + $0x30] sm:$0xff]
        %v481 = vld [vmem:[%s475 + $0x38] sm:$0xff]
        %v482 = vld [vmem:[%s475 + $0x48] sm:$0xff]
        %v483 = vld [vmem:[%s475 + $0x50] sm:$0xff]
        %v484 = vld [vmem:[%s475 + $0x60] sm:$0xff]
        %v485 = vld [vmem:[%s475 + $0x68] sm:$0xff]
        %v486 = vld [vmem:[%s475 + $0x78] sm:$0xff]
        %v487 = vld [vmem:[%s475 + $0x80] sm:$0xff]
        %v488 = vld [vmem:[%s475 + $0x90] sm:$0xff]
        %v489 = vld [vmem:[%s475 + $0x98] sm:$0xff]
        %v490 = vld [vmem:[%s475 + $0xa8] sm:$0xff]
        %v491 = vld [vmem:[%s475 + $0xb0] sm:$0xff]
        %v492 = vlaneseq
        %v493 = vshrl.u32 %v492, 7
        %v494 = vsub.s32 3, %v493
        %v495 = vrot.slane %v312, %v494
        %v496 = vmul.f32 %v476, %v495
        %v497 = vmul.f32 %v477, %v495
        %v498 = vmul.f32 %v478, %v495
        %v499 = vmul.f32 %v479, %v495
        %v500 = vmul.f32 %v480, %v495
        %v501 = vmul.f32 %v481, %v495
        %v502 = vmul.f32 %v482, %v495
        %v503 = vmul.f32 %v483, %v495
        %v504 = vmul.f32 %v484, %v495
        %v505 = vmul.f32 %v485, %v495
        %v506 = vmul.f32 %v486, %v495
        %v507 = vmul.f32 %v487, %v495
        %v508 = vmul.f32 %v488, %v495
        %v509 = vmul.f32 %v489, %v495
        %v510 = vmul.f32 %v490, %v495
        %v511 = vmul.f32 %v491, %v495
        %v512 = vadd.f32 %v457, %v496
        %v513 = vadd.f32 %v458, %v497
        %v514 = vadd.f32 %v459, %v498
        %v515 = vadd.f32 %v460, %v499
        %v516 = vadd.f32 %v461, %v500
        %v517 = vadd.f32 %v462, %v501
        %v518 = vadd.f32 %v463, %v502
        %v519 = vadd.f32 %v464, %v503
        %v520 = vadd.f32 %v465, %v504
        %v521 = vadd.f32 %v466, %v505
        %v522 = vadd.f32 %v467, %v506
        %v523 = vadd.f32 %v468, %v507
        %v524 = vadd.f32 %v469, %v508
        %v525 = vadd.f32 %v470, %v509
        %v526 = vadd.f32 %v471, %v510
        %v527 = vadd.f32 %v472, %v511
        %v528 = vld [vmem:[%s475 + $0x1] sm:$0xff]
        %v529 = vld [vmem:[%s475 + $0x9] sm:$0xff]
        %v530 = vld [vmem:[%s475 + $0x19] sm:$0xff]
        %v531 = vld [vmem:[%s475 + $0x21] sm:$0xff]
        %v532 = vld [vmem:[%s475 + $0x31] sm:$0xff]
        %v533 = vld [vmem:[%s475 + $0x39] sm:$0xff]
        %v534 = vld [vmem:[%s475 + $0x49] sm:$0xff]
        %v535 = vld [vmem:[%s475 + $0x51] sm:$0xff]
        %v536 = vld [vmem:[%s475 + $0x61] sm:$0xff]
        %v537 = vld [vmem:[%s475 + $0x69] sm:$0xff]
        %v538 = vld [vmem:[%s475 + $0x79] sm:$0xff]
        %v539 = vld [vmem:[%s475 + $0x81] sm:$0xff]
        %v540 = vld [vmem:[%s475 + $0x91] sm:$0xff]
        %v541 = vld [vmem:[%s475 + $0x99] sm:$0xff]
        %v542 = vld [vmem:[%s475 + $0xa9] sm:$0xff]
        %v543 = vld [vmem:[%s475 + $0xb1] sm:$0xff]
        %v544 = vlaneseq
        %v545 = vshrl.u32 %v544, 7
        %v546 = vsub.s32 4, %v545
        %v547 = vrot.slane %v312, %v546
        %v548 = vmul.f32 %v528, %v547
        %v549 = vmul.f32 %v529, %v547
        %v550 = vmul.f32 %v530, %v547
        %v551 = vmul.f32 %v531, %v547
        %v552 = vmul.f32 %v532, %v547
        %v553 = vmul.f32 %v533, %v547
        %v554 = vmul.f32 %v534, %v547
        %v555 = vmul.f32 %v535, %v547
        %v556 = vmul.f32 %v536, %v547
        %v557 = vmul.f32 %v537, %v547
        %v558 = vmul.f32 %v538, %v547
        %v559 = vmul.f32 %v539, %v547
        %v560 = vmul.f32 %v540, %v547
        %v561 = vmul.f32 %v541, %v547
        %v562 = vmul.f32 %v542, %v547
        %v563 = vmul.f32 %v543, %v547
        %v564 = vadd.f32 %v512, %v548
        %v565 = vadd.f32 %v513, %v549
        %v566 = vadd.f32 %v514, %v550
        %v567 = vadd.f32 %v515, %v551
        %v568 = vadd.f32 %v516, %v552
        %v569 = vadd.f32 %v517, %v553
        %v570 = vadd.f32 %v518, %v554
        %v571 = vadd.f32 %v519, %v555
        %v572 = vadd.f32 %v520, %v556
        %v573 = vadd.f32 %v521, %v557
        %v574 = vadd.f32 %v522, %v558
        %v575 = vadd.f32 %v523, %v559
        %v576 = vadd.f32 %v524, %v560
        %v577 = vadd.f32 %v525, %v561
        %v578 = vadd.f32 %v526, %v562
        %v579 = vadd.f32 %v527, %v563
        %v580 = vld [vmem:[%s475 + $0x2] sm:$0xff]
        %v581 = vld [vmem:[%s475 + $0xa] sm:$0xff]
        %v582 = vld [vmem:[%s475 + $0x1a] sm:$0xff]
        %v583 = vld [vmem:[%s475 + $0x22] sm:$0xff]
        %v584 = vld [vmem:[%s475 + $0x32] sm:$0xff]
        %v585 = vld [vmem:[%s475 + $0x3a] sm:$0xff]
        %v586 = vld [vmem:[%s475 + $0x4a] sm:$0xff]
        %v587 = vld [vmem:[%s475 + $0x52] sm:$0xff]
        %v588 = vld [vmem:[%s475 + $0x62] sm:$0xff]
        %v589 = vld [vmem:[%s475 + $0x6a] sm:$0xff]
        %v590 = vld [vmem:[%s475 + $0x7a] sm:$0xff]
        %v591 = vld [vmem:[%s475 + $0x82] sm:$0xff]
        %v592 = vld [vmem:[%s475 + $0x92] sm:$0xff]
        %v593 = vld [vmem:[%s475 + $0x9a] sm:$0xff]
        %v594 = vld [vmem:[%s475 + $0xaa] sm:$0xff]
        %v595 = vld [vmem:[%s475 + $0xb2] sm:$0xff]
        %v596 = vlaneseq
        %v597 = vshrl.u32 %v596, 7
        %v598 = vsub.s32 5, %v597
        %v599 = vrot.slane %v312, %v598
        %v600 = vmul.f32 %v580, %v599
        %v601 = vmul.f32 %v581, %v599
        %v602 = vmul.f32 %v582, %v599
        %v603 = vmul.f32 %v583, %v599
        %v604 = vmul.f32 %v584, %v599
        %v605 = vmul.f32 %v585, %v599
        %v606 = vmul.f32 %v586, %v599
        %v607 = vmul.f32 %v587, %v599
        %v608 = vmul.f32 %v588, %v599
        %v609 = vmul.f32 %v589, %v599
        %v610 = vmul.f32 %v590, %v599
        %v611 = vmul.f32 %v591, %v599
        %v612 = vmul.f32 %v592, %v599
        %v613 = vmul.f32 %v593, %v599
        %v614 = vmul.f32 %v594, %v599
        %v615 = vmul.f32 %v595, %v599
        %v616 = vadd.f32 %v564, %v600
        %v617 = vadd.f32 %v565, %v601
        %v618 = vadd.f32 %v566, %v602
        %v619 = vadd.f32 %v567, %v603
        %v620 = vadd.f32 %v568, %v604
        %v621 = vadd.f32 %v569, %v605
        %v622 = vadd.f32 %v570, %v606
        %v623 = vadd.f32 %v571, %v607
        %v624 = vadd.f32 %v572, %v608
        %v625 = vadd.f32 %v573, %v609
        %v626 = vadd.f32 %v574, %v610
        %v627 = vadd.f32 %v575, %v611
        %v628 = vadd.f32 %v576, %v612
        %v629 = vadd.f32 %v577, %v613
        %v630 = vadd.f32 %v578, %v614
        %v631 = vadd.f32 %v579, %v615
        %s632 = sadd.s32 0, 2
        %s633 = smul.u32 %s632, 24
        %s634 = scalar_lea.vmem [#allocation2], %s633
        %v635 = vld [vmem:[%s634] sm:$0xff]
        %v636 = vld [vmem:[%s634 + $0x8] sm:$0xff]
        %v637 = vld [vmem:[%s634 + $0x18] sm:$0xff]
        %v638 = vld [vmem:[%s634 + $0x20] sm:$0xff]
        %v639 = vld [vmem:[%s634 + $0x30] sm:$0xff]
        %v640 = vld [vmem:[%s634 + $0x38] sm:$0xff]
        %v641 = vld [vmem:[%s634 + $0x48] sm:$0xff]
        %v642 = vld [vmem:[%s634 + $0x50] sm:$0xff]
        %v643 = vld [vmem:[%s634 + $0x60] sm:$0xff]
        %v644 = vld [vmem:[%s634 + $0x68] sm:$0xff]
        %v645 = vld [vmem:[%s634 + $0x78] sm:$0xff]
        %v646 = vld [vmem:[%s634 + $0x80] sm:$0xff]
        %v647 = vld [vmem:[%s634 + $0x90] sm:$0xff]
        %v648 = vld [vmem:[%s634 + $0x98] sm:$0xff]
        %v649 = vld [vmem:[%s634 + $0xa8] sm:$0xff]
        %v650 = vld [vmem:[%s634 + $0xb0] sm:$0xff]
        %v651 = vlaneseq
        %v652 = vshrl.u32 %v651, 7
        %v653 = vsub.s32 6, %v652
        %v654 = vrot.slane %v312, %v653
        %v655 = vmul.f32 %v635, %v654
        %v656 = vmul.f32 %v636, %v654
        %v657 = vmul.f32 %v637, %v654
        %v658 = vmul.f32 %v638, %v654
        %v659 = vmul.f32 %v639, %v654
        %v660 = vmul.f32 %v640, %v654
        %v661 = vmul.f32 %v641, %v654
        %v662 = vmul.f32 %v642, %v654
        %v663 = vmul.f32 %v643, %v654
        %v664 = vmul.f32 %v644, %v654
        %v665 = vmul.f32 %v645, %v654
        %v666 = vmul.f32 %v646, %v654
        %v667 = vmul.f32 %v647, %v654
        %v668 = vmul.f32 %v648, %v654
        %v669 = vmul.f32 %v649, %v654
        %v670 = vmul.f32 %v650, %v654
        %v671 = vadd.f32 %v616, %v655
        %v672 = vadd.f32 %v617, %v656
        %v673 = vadd.f32 %v618, %v657
        %v674 = vadd.f32 %v619, %v658
        %v675 = vadd.f32 %v620, %v659
        %v676 = vadd.f32 %v621, %v660
        %v677 = vadd.f32 %v622, %v661
        %v678 = vadd.f32 %v623, %v662
        %v679 = vadd.f32 %v624, %v663
        %v680 = vadd.f32 %v625, %v664
        %v681 = vadd.f32 %v626, %v665
        %v682 = vadd.f32 %v627, %v666
        %v683 = vadd.f32 %v628, %v667
        %v684 = vadd.f32 %v629, %v668
        %v685 = vadd.f32 %v630, %v669
        %v686 = vadd.f32 %v631, %v670
        %v687 = vld [vmem:[%s634 + $0x1] sm:$0xff]
        %v688 = vld [vmem:[%s634 + $0x9] sm:$0xff]
        %v689 = vld [vmem:[%s634 + $0x19] sm:$0xff]
        %v690 = vld [vmem:[%s634 + $0x21] sm:$0xff]
        %v691 = vld [vmem:[%s634 + $0x31] sm:$0xff]
        %v692 = vld [vmem:[%s634 + $0x39] sm:$0xff]
        %v693 = vld [vmem:[%s634 + $0x49] sm:$0xff]
        %v694 = vld [vmem:[%s634 + $0x51] sm:$0xff]
        %v695 = vld [vmem:[%s634 + $0x61] sm:$0xff]
        %v696 = vld [vmem:[%s634 + $0x69] sm:$0xff]
        %v697 = vld [vmem:[%s634 + $0x79] sm:$0xff]
        %v698 = vld [vmem:[%s634 + $0x81] sm:$0xff]
        %v699 = vld [vmem:[%s634 + $0x91] sm:$0xff]
        %v700 = vld [vmem:[%s634 + $0x99] sm:$0xff]
        %v701 = vld [vmem:[%s634 + $0xa9] sm:$0xff]
        %v702 = vld [vmem:[%s634 + $0xb1] sm:$0xff]
        %v703 = vlaneseq
        %v704 = vshrl.u32 %v703, 7
        %v705 = vsub.s32 7, %v704
        %v706 = vrot.slane %v312, %v705
        %v707 = vmul.f32 %v687, %v706
        %v708 = vmul.f32 %v688, %v706
        %v709 = vmul.f32 %v689, %v706
        %v710 = vmul.f32 %v690, %v706
        %v711 = vmul.f32 %v691, %v706
        %v712 = vmul.f32 %v692, %v706
        %v713 = vmul.f32 %v693, %v706
        %v714 = vmul.f32 %v694, %v706
        %v715 = vmul.f32 %v695, %v706
        %v716 = vmul.f32 %v696, %v706
        %v717 = vmul.f32 %v697, %v706
        %v718 = vmul.f32 %v698, %v706
        %v719 = vmul.f32 %v699, %v706
        %v720 = vmul.f32 %v700, %v706
        %v721 = vmul.f32 %v701, %v706
        %v722 = vmul.f32 %v702, %v706
        %v723 = vadd.f32 %v671, %v707
        %v724 = vadd.f32 %v672, %v708
        %v725 = vadd.f32 %v673, %v709
        %v726 = vadd.f32 %v674, %v710
        %v727 = vadd.f32 %v675, %v711
        %v728 = vadd.f32 %v676, %v712
        %v729 = vadd.f32 %v677, %v713
        %v730 = vadd.f32 %v678, %v714
        %v731 = vadd.f32 %v679, %v715
        %v732 = vadd.f32 %v680, %v716
        %v733 = vadd.f32 %v681, %v717
        %v734 = vadd.f32 %v682, %v718
        %v735 = vadd.f32 %v683, %v719
        %v736 = vadd.f32 %v684, %v720
        %v737 = vadd.f32 %v685, %v721
        %v738 = vadd.f32 %v686, %v722
        %v739 = vld [vmem:[%s634 + $0x2] sm:$0xff]
        %v740 = vld [vmem:[%s634 + $0xa] sm:$0xff]
        %v741 = vld [vmem:[%s634 + $0x1a] sm:$0xff]
        %v742 = vld [vmem:[%s634 + $0x22] sm:$0xff]
        %v743 = vld [vmem:[%s634 + $0x32] sm:$0xff]
        %v744 = vld [vmem:[%s634 + $0x3a] sm:$0xff]
        %v745 = vld [vmem:[%s634 + $0x4a] sm:$0xff]
        %v746 = vld [vmem:[%s634 + $0x52] sm:$0xff]
        %v747 = vld [vmem:[%s634 + $0x62] sm:$0xff]
        %v748 = vld [vmem:[%s634 + $0x6a] sm:$0xff]
        %v749 = vld [vmem:[%s634 + $0x7a] sm:$0xff]
        %v750 = vld [vmem:[%s634 + $0x82] sm:$0xff]
        %v751 = vld [vmem:[%s634 + $0x92] sm:$0xff]
        %v752 = vld [vmem:[%s634 + $0x9a] sm:$0xff]
        %v753 = vld [vmem:[%s634 + $0xaa] sm:$0xff]
        %v754 = vld [vmem:[%s634 + $0xb2] sm:$0xff]
        %v755 = vlaneseq
        %v756 = vshrl.u32 %v755, 7
        %v757 = vsub.s32 0, %v756
        %v758 = vrot.slane %v313, %v757
        %v759 = vmul.f32 %v739, %v758
        %v760 = vmul.f32 %v740, %v758
        %v761 = vmul.f32 %v741, %v758
        %v762 = vmul.f32 %v742, %v758
        %v763 = vmul.f32 %v743, %v758
        %v764 = vmul.f32 %v744, %v758
        %v765 = vmul.f32 %v745, %v758
        %v766 = vmul.f32 %v746, %v758
        %v767 = vmul.f32 %v747, %v758
        %v768 = vmul.f32 %v748, %v758
        %v769 = vmul.f32 %v749, %v758
        %v770 = vmul.f32 %v750, %v758
        %v771 = vmul.f32 %v751, %v758
        %v772 = vmul.f32 %v752, %v758
        %v773 = vmul.f32 %v753, %v758
        %v774 = vmul.f32 %v754, %v758
        %v775 = vadd.f32 %v723, %v759
        %v776 = vadd.f32 %v724, %v760
        %v777 = vadd.f32 %v725, %v761
        %v778 = vadd.f32 %v726, %v762
        %v779 = vadd.f32 %v727, %v763
        %v780 = vadd.f32 %v728, %v764
        %v781 = vadd.f32 %v729, %v765
        %v782 = vadd.f32 %v730, %v766
        %v783 = vadd.f32 %v731, %v767
        %v784 = vadd.f32 %v732, %v768
        %v785 = vadd.f32 %v733, %v769
        %v786 = vadd.f32 %v734, %v770
        %v787 = vadd.f32 %v735, %v771
        %v788 = vadd.f32 %v736, %v772
        %v789 = vadd.f32 %v737, %v773
        %v790 = vadd.f32 %v738, %v774
        %v792 = vlaneseq
        %v793 = vshrl.u32 %v792, 7
        %v794 = vsub.s32 0, %v793
        %v795 = vrot.slane %v314, %v794
        %v797 = vadd.f32 %v775, %v795
        %v798 = vadd.f32 %v776, %v795
        %v799 = vadd.f32 %v777, %v795
        %v800 = vadd.f32 %v778, %v795
        %v801 = vadd.f32 %v779, %v795
        %v802 = vadd.f32 %v780, %v795
        %v803 = vadd.f32 %v781, %v795
        %v804 = vadd.f32 %v782, %v795
        %v805 = vadd.f32 %v783, %v795
        %v806 = vadd.f32 %v784, %v795
        %v807 = vadd.f32 %v785, %v795
        %v808 = vadd.f32 %v786, %v795
        %v809 = vadd.f32 %v787, %v795
        %v810 = vadd.f32 %v788, %v795
        %v811 = vadd.f32 %v789, %v795
        %v812 = vadd.f32 %v790, %v795
        %s813 = smul.u32 0, 16
        %s814 = scalar_lea.vmem %s203, %s813 [#allocation8]
        %815 = vst [vmem:[%s814] sm:$0xff] %v797
        %816 = vst [vmem:[%s814 + $0x8] sm:$0xff] %v798
        %817 = vst [vmem:[%s814 + $0x10] sm:$0xff] %v799
        %818 = vst [vmem:[%s814 + $0x18] sm:$0xff] %v800
        %819 = vst [vmem:[%s814 + $0x20] sm:$0xff] %v801
        %820 = vst [vmem:[%s814 + $0x28] sm:$0xff] %v802
        %821 = vst [vmem:[%s814 + $0x30] sm:$0xff] %v803
        %822 = vst [vmem:[%s814 + $0x38] sm:$0xff] %v804
        %823 = vst [vmem:[%s814 + $0x40] sm:$0xff] %v805
        %824 = vst [vmem:[%s814 + $0x48] sm:$0xff] %v806
        %825 = vst [vmem:[%s814 + $0x50] sm:$0xff] %v807
        %826 = vst [vmem:[%s814 + $0x58] sm:$0xff] %v808
        %827 = vst [vmem:[%s814 + $0x60] sm:$0xff] %v809
        %828 = vst [vmem:[%s814 + $0x68] sm:$0xff] %v810
        %829 = vst [vmem:[%s814 + $0x70] sm:$0xff] %v811
        %830 = vst [vmem:[%s814 + $0x78] sm:$0xff] %v812
        %s831 = smul.u32 8, 24
        %s832 = scalar_lea.vmem [#allocation2], %s831
        %v833 = vld [vmem:[%s832] sm:$0xff]
        %v834 = vld [vmem:[%s832 + $0x8] sm:$0xff]
        %v835 = vld [vmem:[%s832 + $0x18] sm:$0xff]
        %v836 = vld [vmem:[%s832 + $0x20] sm:$0xff]
        %v837 = vld [vmem:[%s832 + $0x30] sm:$0xff]
        %v838 = vld [vmem:[%s832 + $0x38] sm:$0xff]
        %v839 = vld [vmem:[%s832 + $0x48] sm:$0xff]
        %v840 = vld [vmem:[%s832 + $0x50] sm:$0xff]
        %v841 = vld [vmem:[%s832 + $0x60] sm:$0xff]
        %v842 = vld [vmem:[%s832 + $0x68] sm:$0xff]
        %v843 = vld [vmem:[%s832 + $0x78] sm:$0xff]
        %v844 = vld [vmem:[%s832 + $0x80] sm:$0xff]
        %v845 = vld [vmem:[%s832 + $0x90] sm:$0xff]
        %v846 = vld [vmem:[%s832 + $0x98] sm:$0xff]
        %v847 = vld [vmem:[%s832 + $0xa8] sm:$0xff]
        %v848 = vld [vmem:[%s832 + $0xb0] sm:$0xff]
        %v849 = vmul.f32 %v833, %v336
        %v850 = vmul.f32 %v834, %v336
        %v851 = vmul.f32 %v835, %v336
        %v852 = vmul.f32 %v836, %v336
        %v853 = vmul.f32 %v837, %v336
        %v854 = vmul.f32 %v838, %v336
        %v855 = vmul.f32 %v839, %v336
        %v856 = vmul.f32 %v840, %v336
        %v857 = vmul.f32 %v841, %v336
        %v858 = vmul.f32 %v842, %v336
        %v859 = vmul.f32 %v843, %v336
        %v860 = vmul.f32 %v844, %v336
        %v861 = vmul.f32 %v845, %v336
        %v862 = vmul.f32 %v846, %v336
        %v863 = vmul.f32 %v847, %v336
        %v864 = vmul.f32 %v848, %v336
        %v865 = vadd.f32 %v849, 0.0
        %v866 = vadd.f32 %v850, 0.0
        %v867 = vadd.f32 %v851, 0.0
        %v868 = vadd.f32 %v852, 0.0
        %v869 = vadd.f32 %v853, 0.0
        %v870 = vadd.f32 %v854, 0.0
        %v871 = vadd.f32 %v855, 0.0
        %v872 = vadd.f32 %v856, 0.0
        %v873 = vadd.f32 %v857, 0.0
        %v874 = vadd.f32 %v858, 0.0
        %v875 = vadd.f32 %v859, 0.0
        %v876 = vadd.f32 %v860, 0.0
        %v877 = vadd.f32 %v861, 0.0
        %v878 = vadd.f32 %v862, 0.0
        %v879 = vadd.f32 %v863, 0.0
        %v880 = vadd.f32 %v864, 0.0
        %v881 = vld [vmem:[%s832 + $0x1] sm:$0xff]
        %v882 = vld [vmem:[%s832 + $0x9] sm:$0xff]
        %v883 = vld [vmem:[%s832 + $0x19] sm:$0xff]
        %v884 = vld [vmem:[%s832 + $0x21] sm:$0xff]
        %v885 = vld [vmem:[%s832 + $0x31] sm:$0xff]
        %v886 = vld [vmem:[%s832 + $0x39] sm:$0xff]
        %v887 = vld [vmem:[%s832 + $0x49] sm:$0xff]
        %v888 = vld [vmem:[%s832 + $0x51] sm:$0xff]
        %v889 = vld [vmem:[%s832 + $0x61] sm:$0xff]
        %v890 = vld [vmem:[%s832 + $0x69] sm:$0xff]
        %v891 = vld [vmem:[%s832 + $0x79] sm:$0xff]
        %v892 = vld [vmem:[%s832 + $0x81] sm:$0xff]
        %v893 = vld [vmem:[%s832 + $0x91] sm:$0xff]
        %v894 = vld [vmem:[%s832 + $0x99] sm:$0xff]
        %v895 = vld [vmem:[%s832 + $0xa9] sm:$0xff]
        %v896 = vld [vmem:[%s832 + $0xb1] sm:$0xff]
        %v897 = vmul.f32 %v881, %v388
        %v898 = vmul.f32 %v882, %v388
        %v899 = vmul.f32 %v883, %v388
        %v900 = vmul.f32 %v884, %v388
        %v901 = vmul.f32 %v885, %v388
        %v902 = vmul.f32 %v886, %v388
        %v903 = vmul.f32 %v887, %v388
        %v904 = vmul.f32 %v888, %v388
        %v905 = vmul.f32 %v889, %v388
        %v906 = vmul.f32 %v890, %v388
        %v907 = vmul.f32 %v891, %v388
        %v908 = vmul.f32 %v892, %v388
        %v909 = vmul.f32 %v893, %v388
        %v910 = vmul.f32 %v894, %v388
        %v911 = vmul.f32 %v895, %v388
        %v912 = vmul.f32 %v896, %v388
        %v913 = vadd.f32 %v865, %v897
        %v914 = vadd.f32 %v866, %v898
        %v915 = vadd.f32 %v867, %v899
        %v916 = vadd.f32 %v868, %v900
        %v917 = vadd.f32 %v869, %v901
        %v918 = vadd.f32 %v870, %v902
        %v919 = vadd.f32 %v871, %v903
        %v920 = vadd.f32 %v872, %v904
        %v921 = vadd.f32 %v873, %v905
        %v922 = vadd.f32 %v874, %v906
        %v923 = vadd.f32 %v875, %v907
        %v924 = vadd.f32 %v876, %v908
        %v925 = vadd.f32 %v877, %v909
        %v926 = vadd.f32 %v878, %v910
        %v927 = vadd.f32 %v879, %v911
        %v928 = vadd.f32 %v880, %v912
        %v929 = vld [vmem:[%s832 + $0x2] sm:$0xff]
        %v930 = vld [vmem:[%s832 + $0xa] sm:$0xff]
        %v931 = vld [vmem:[%s832 + $0x1a] sm:$0xff]
        %v932 = vld [vmem:[%s832 + $0x22] sm:$0xff]
        %v933 = vld [vmem:[%s832 + $0x32] sm:$0xff]
        %v934 = vld [vmem:[%s832 + $0x3a] sm:$0xff]
        %v935 = vld [vmem:[%s832 + $0x4a] sm:$0xff]
        %v936 = vld [vmem:[%s832 + $0x52] sm:$0xff]
        %v937 = vld [vmem:[%s832 + $0x62] sm:$0xff]
        %v938 = vld [vmem:[%s832 + $0x6a] sm:$0xff]
        %v939 = vld [vmem:[%s832 + $0x7a] sm:$0xff]
        %v940 = vld [vmem:[%s832 + $0x82] sm:$0xff]
        %v941 = vld [vmem:[%s832 + $0x92] sm:$0xff]
        %v942 = vld [vmem:[%s832 + $0x9a] sm:$0xff]
        %v943 = vld [vmem:[%s832 + $0xaa] sm:$0xff]
        %v944 = vld [vmem:[%s832 + $0xb2] sm:$0xff]
        %v945 = vmul.f32 %v929, %v440
        %v946 = vmul.f32 %v930, %v440
        %v947 = vmul.f32 %v931, %v440
        %v948 = vmul.f32 %v932, %v440
        %v949 = vmul.f32 %v933, %v440
        %v950 = vmul.f32 %v934, %v440
        %v951 = vmul.f32 %v935, %v440
        %v952 = vmul.f32 %v936, %v440
        %v953 = vmul.f32 %v937, %v440
        %v954 = vmul.f32 %v938, %v440
        %v955 = vmul.f32 %v939, %v440
        %v956 = vmul.f32 %v940, %v440
        %v957 = vmul.f32 %v941, %v440
        %v958 = vmul.f32 %v942, %v440
        %v959 = vmul.f32 %v943, %v440
        %v960 = vmul.f32 %v944, %v440
        %v961 = vadd.f32 %v913, %v945
        %v962 = vadd.f32 %v914, %v946
        %v963 = vadd.f32 %v915, %v947
        %v964 = vadd.f32 %v916, %v948
        %v965 = vadd.f32 %v917, %v949
        %v966 = vadd.f32 %v918, %v950
        %v967 = vadd.f32 %v919, %v951
        %v968 = vadd.f32 %v920, %v952
        %v969 = vadd.f32 %v921, %v953
        %v970 = vadd.f32 %v922, %v954
        %v971 = vadd.f32 %v923, %v955
        %v972 = vadd.f32 %v924, %v956
        %v973 = vadd.f32 %v925, %v957
        %v974 = vadd.f32 %v926, %v958
        %v975 = vadd.f32 %v927, %v959
        %v976 = vadd.f32 %v928, %v960
        %s977 = sadd.s32 8, 1
        %s978 = smul.u32 %s977, 24
        %s979 = scalar_lea.vmem [#allocation2], %s978
        %v980 = vld [vmem:[%s979] sm:$0xff]
        %v981 = vld [vmem:[%s979 + $0x8] sm:$0xff]
        %v982 = vld [vmem:[%s979 + $0x18] sm:$0xff]
        %v983 = vld [vmem:[%s979 + $0x20] sm:$0xff]
        %v984 = vld [vmem:[%s979 + $0x30] sm:$0xff]
        %v985 = vld [vmem:[%s979 + $0x38] sm:$0xff]
        %v986 = vld [vmem:[%s979 + $0x48] sm:$0xff]
        %v987 = vld [vmem:[%s979 + $0x50] sm:$0xff]
        %v988 = vld [vmem:[%s979 + $0x60] sm:$0xff]
        %v989 = vld [vmem:[%s979 + $0x68] sm:$0xff]
        %v990 = vld [vmem:[%s979 + $0x78] sm:$0xff]
        %v991 = vld [vmem:[%s979 + $0x80] sm:$0xff]
        %v992 = vld [vmem:[%s979 + $0x90] sm:$0xff]
        %v993 = vld [vmem:[%s979 + $0x98] sm:$0xff]
        %v994 = vld [vmem:[%s979 + $0xa8] sm:$0xff]
        %v995 = vld [vmem:[%s979 + $0xb0] sm:$0xff]
        %v996 = vmul.f32 %v980, %v495
        %v997 = vmul.f32 %v981, %v495
        %v998 = vmul.f32 %v982, %v495
        %v999 = vmul.f32 %v983, %v495
        %v1000 = vmul.f32 %v984, %v495
        %v1001 = vmul.f32 %v985, %v495
        %v1002 = vmul.f32 %v986, %v495
        %v1003 = vmul.f32 %v987, %v495
        %v1004 = vmul.f32 %v988, %v495
        %v1005 = vmul.f32 %v989, %v495
        %v1006 = vmul.f32 %v990, %v495
        %v1007 = vmul.f32 %v991, %v495
        %v1008 = vmul.f32 %v992, %v495
        %v1009 = vmul.f32 %v993, %v495
        %v1010 = vmul.f32 %v994, %v495
        %v1011 = vmul.f32 %v995, %v495
        %v1012 = vadd.f32 %v961, %v996
        %v1013 = vadd.f32 %v962, %v997
        %v1014 = vadd.f32 %v963, %v998
        %v1015 = vadd.f32 %v964, %v999
        %v1016 = vadd.f32 %v965, %v1000
        %v1017 = vadd.f32 %v966, %v1001
        %v1018 = vadd.f32 %v967, %v1002
        %v1019 = vadd.f32 %v968, %v1003
        %v1020 = vadd.f32 %v969, %v1004
        %v1021 = vadd.f32 %v970, %v1005
        %v1022 = vadd.f32 %v971, %v1006
        %v1023 = vadd.f32 %v972, %v1007
        %v1024 = vadd.f32 %v973, %v1008
        %v1025 = vadd.f32 %v974, %v1009
        %v1026 = vadd.f32 %v975, %v1010
        %v1027 = vadd.f32 %v976, %v1011
        %v1028 = vld [vmem:[%s979 + $0x1] sm:$0xff]
        %v1029 = vld [vmem:[%s979 + $0x9] sm:$0xff]
        %v1030 = vld [vmem:[%s979 + $0x19] sm:$0xff]
        %v1031 = vld [vmem:[%s979 + $0x21] sm:$0xff]
        %v1032 = vld [vmem:[%s979 + $0x31] sm:$0xff]
        %v1033 = vld [vmem:[%s979 + $0x39] sm:$0xff]
        %v1034 = vld [vmem:[%s979 + $0x49] sm:$0xff]
        %v1035 = vld [vmem:[%s979 + $0x51] sm:$0xff]
        %v1036 = vld [vmem:[%s979 + $0x61] sm:$0xff]
        %v1037 = vld [vmem:[%s979 + $0x69] sm:$0xff]
        %v1038 = vld [vmem:[%s979 + $0x79] sm:$0xff]
        %v1039 = vld [vmem:[%s979 + $0x81] sm:$0xff]
        %v1040 = vld [vmem:[%s979 + $0x91] sm:$0xff]
        %v1041 = vld [vmem:[%s979 + $0x99] sm:$0xff]
        %v1042 = vld [vmem:[%s979 + $0xa9] sm:$0xff]
        %v1043 = vld [vmem:[%s979 + $0xb1] sm:$0xff]
        %v1044 = vmul.f32 %v1028, %v547
        %v1045 = vmul.f32 %v1029, %v547
        %v1046 = vmul.f32 %v1030, %v547
        %v1047 = vmul.f32 %v1031, %v547
        %v1048 = vmul.f32 %v1032, %v547
        %v1049 = vmul.f32 %v1033, %v547
        %v1050 = vmul.f32 %v1034, %v547
        %v1051 = vmul.f32 %v1035, %v547
        %v1052 = vmul.f32 %v1036, %v547
        %v1053 = vmul.f32 %v1037, %v547
        %v1054 = vmul.f32 %v1038, %v547
        %v1055 = vmul.f32 %v1039, %v547
        %v1056 = vmul.f32 %v1040, %v547
        %v1057 = vmul.f32 %v1041, %v547
        %v1058 = vmul.f32 %v1042, %v547
        %v1059 = vmul.f32 %v1043, %v547
        %v1060 = vadd.f32 %v1012, %v1044
        %v1061 = vadd.f32 %v1013, %v1045
        %v1062 = vadd.f32 %v1014, %v1046
        %v1063 = vadd.f32 %v1015, %v1047
        %v1064 = vadd.f32 %v1016, %v1048
        %v1065 = vadd.f32 %v1017, %v1049
        %v1066 = vadd.f32 %v1018, %v1050
        %v1067 = vadd.f32 %v1019, %v1051
        %v1068 = vadd.f32 %v1020, %v1052
        %v1069 = vadd.f32 %v1021, %v1053
        %v1070 = vadd.f32 %v1022, %v1054
        %v1071 = vadd.f32 %v1023, %v1055
        %v1072 = vadd.f32 %v1024, %v1056
        %v1073 = vadd.f32 %v1025, %v1057
        %v1074 = vadd.f32 %v1026, %v1058
        %v1075 = vadd.f32 %v1027, %v1059
        %v1076 = vld [vmem:[%s979 + $0x2] sm:$0xff]
        %v1077 = vld [vmem:[%s979 + $0xa] sm:$0xff]
        %v1078 = vld [vmem:[%s979 + $0x1a] sm:$0xff]
        %v1079 = vld [vmem:[%s979 + $0x22] sm:$0xff]
        %v1080 = vld [vmem:[%s979 + $0x32] sm:$0xff]
        %v1081 = vld [vmem:[%s979 + $0x3a] sm:$0xff]
        %v1082 = vld [vmem:[%s979 + $0x4a] sm:$0xff]
        %v1083 = vld [vmem:[%s979 + $0x52] sm:$0xff]
        %v1084 = vld [vmem:[%s979 + $0x62] sm:$0xff]
        %v1085 = vld [vmem:[%s979 + $0x6a] sm:$0xff]
        %v1086 = vld [vmem:[%s979 + $0x7a] sm:$0xff]
        %v1087 = vld [vmem:[%s979 + $0x82] sm:$0xff]
        %v1088 = vld [vmem:[%s979 + $0x92] sm:$0xff]
        %v1089 = vld [vmem:[%s979 + $0x9a] sm:$0xff]
        %v1090 = vld [vmem:[%s979 + $0xaa] sm:$0xff]
        %v1091 = vld [vmem:[%s979 + $0xb2] sm:$0xff]
        %v1092 = vmul.f32 %v1076, %v599
        %v1093 = vmul.f32 %v1077, %v599
        %v1094 = vmul.f32 %v1078, %v599
        %v1095 = vmul.f32 %v1079, %v599
        %v1096 = vmul.f32 %v1080, %v599
        %v1097 = vmul.f32 %v1081, %v599
        %v1098 = vmul.f32 %v1082, %v599
        %v1099 = vmul.f32 %v1083, %v599
        %v1100 = vmul.f32 %v1084, %v599
        %v1101 = vmul.f32 %v1085, %v599
        %v1102 = vmul.f32 %v1086, %v599
        %v1103 = vmul.f32 %v1087, %v599
        %v1104 = vmul.f32 %v1088, %v599
        %v1105 = vmul.f32 %v1089, %v599
        %v1106 = vmul.f32 %v1090, %v599
        %v1107 = vmul.f32 %v1091, %v599
        %v1108 = vadd.f32 %v1060, %v1092
        %v1109 = vadd.f32 %v1061, %v1093
        %v1110 = vadd.f32 %v1062, %v1094
        %v1111 = vadd.f32 %v1063, %v1095
        %v1112 = vadd.f32 %v1064, %v1096
        %v1113 = vadd.f32 %v1065, %v1097
        %v1114 = vadd.f32 %v1066, %v1098
        %v1115 = vadd.f32 %v1067, %v1099
        %v1116 = vadd.f32 %v1068, %v1100
        %v1117 = vadd.f32 %v1069, %v1101
        %v1118 = vadd.f32 %v1070, %v1102
        %v1119 = vadd.f32 %v1071, %v1103
        %v1120 = vadd.f32 %v1072, %v1104
        %v1121 = vadd.f32 %v1073, %v1105
        %v1122 = vadd.f32 %v1074, %v1106
        %v1123 = vadd.f32 %v1075, %v1107
        %s1124 = sadd.s32 8, 2
        %s1125 = smul.u32 %s1124, 24
        %s1126 = scalar_lea.vmem [#allocation2], %s1125
        %v1127 = vld [vmem:[%s1126] sm:$0xff]
        %v1128 = vld [vmem:[%s1126 + $0x8] sm:$0xff]
        %v1129 = vld [vmem:[%s1126 + $0x18] sm:$0xff]
        %v1130 = vld [vmem:[%s1126 + $0x20] sm:$0xff]
        %v1131 = vld [vmem:[%s1126 + $0x30] sm:$0xff]
        %v1132 = vld [vmem:[%s1126 + $0x38] sm:$0xff]
        %v1133 = vld [vmem:[%s1126 + $0x48] sm:$0xff]
        %v1134 = vld [vmem:[%s1126 + $0x50] sm:$0xff]
        %v1135 = vld [vmem:[%s1126 + $0x60] sm:$0xff]
        %v1136 = vld [vmem:[%s1126 + $0x68] sm:$0xff]
        %v1137 = vld [vmem:[%s1126 + $0x78] sm:$0xff]
        %v1138 = vld [vmem:[%s1126 + $0x80] sm:$0xff]
        %v1139 = vld [vmem:[%s1126 + $0x90] sm:$0xff]
        %v1140 = vld [vmem:[%s1126 + $0x98] sm:$0xff]
        %v1141 = vld [vmem:[%s1126 + $0xa8] sm:$0xff]
        %v1142 = vld [vmem:[%s1126 + $0xb0] sm:$0xff]
        %v1143 = vmul.f32 %v1127, %v654
        %v1144 = vmul.f32 %v1128, %v654
        %v1145 = vmul.f32 %v1129, %v654
        %v1146 = vmul.f32 %v1130, %v654
        %v1147 = vmul.f32 %v1131, %v654
        %v1148 = vmul.f32 %v1132, %v654
        %v1149 = vmul.f32 %v1133, %v654
        %v1150 = vmul.f32 %v1134, %v654
        %v1151 = vmul.f32 %v1135, %v654
        %v1152 = vmul.f32 %v1136, %v654
        %v1153 = vmul.f32 %v1137, %v654
        %v1154 = vmul.f32 %v1138, %v654
        %v1155 = vmul.f32 %v1139, %v654
        %v1156 = vmul.f32 %v1140, %v654
        %v1157 = vmul.f32 %v1141, %v654
        %v1158 = vmul.f32 %v1142, %v654
        %v1159 = vadd.f32 %v1108, %v1143
        %v1160 = vadd.f32 %v1109, %v1144
        %v1161 = vadd.f32 %v1110, %v1145
        %v1162 = vadd.f32 %v1111, %v1146
        %v1163 = vadd.f32 %v1112, %v1147
        %v1164 = vadd.f32 %v1113, %v1148
        %v1165 = vadd.f32 %v1114, %v1149
        %v1166 = vadd.f32 %v1115, %v1150
        %v1167 = vadd.f32 %v1116, %v1151
        %v1168 = vadd.f32 %v1117, %v1152
        %v1169 = vadd.f32 %v1118, %v1153
        %v1170 = vadd.f32 %v1119, %v1154
        %v1171 = vadd.f32 %v1120, %v1155
        %v1172 = vadd.f32 %v1121, %v1156
        %v1173 = vadd.f32 %v1122, %v1157
        %v1174 = vadd.f32 %v1123, %v1158
        %v1175 = vld [vmem:[%s1126 + $0x1] sm:$0xff]
        %v1176 = vld [vmem:[%s1126 + $0x9] sm:$0xff]
        %v1177 = vld [vmem:[%s1126 + $0x19] sm:$0xff]
        %v1178 = vld [vmem:[%s1126 + $0x21] sm:$0xff]
        %v1179 = vld [vmem:[%s1126 + $0x31] sm:$0xff]
        %v1180 = vld [vmem:[%s1126 + $0x39] sm:$0xff]
        %v1181 = vld [vmem:[%s1126 + $0x49] sm:$0xff]
        %v1182 = vld [vmem:[%s1126 + $0x51] sm:$0xff]
        %v1183 = vld [vmem:[%s1126 + $0x61] sm:$0xff]
        %v1184 = vld [vmem:[%s1126 + $0x69] sm:$0xff]
        %v1185 = vld [vmem:[%s1126 + $0x79] sm:$0xff]
        %v1186 = vld [vmem:[%s1126 + $0x81] sm:$0xff]
        %v1187 = vld [vmem:[%s1126 + $0x91] sm:$0xff]
        %v1188 = vld [vmem:[%s1126 + $0x99] sm:$0xff]
        %v1189 = vld [vmem:[%s1126 + $0xa9] sm:$0xff]
        %v1190 = vld [vmem:[%s1126 + $0xb1] sm:$0xff]
        %v1191 = vmul.f32 %v1175, %v706
        %v1192 = vmul.f32 %v1176, %v706
        %v1193 = vmul.f32 %v1177, %v706
        %v1194 = vmul.f32 %v1178, %v706
        %v1195 = vmul.f32 %v1179, %v706
        %v1196 = vmul.f32 %v1180, %v706
        %v1197 = vmul.f32 %v1181, %v706
        %v1198 = vmul.f32 %v1182, %v706
        %v1199 = vmul.f32 %v1183, %v706
        %v1200 = vmul.f32 %v1184, %v706
        %v1201 = vmul.f32 %v1185, %v706
        %v1202 = vmul.f32 %v1186, %v706
        %v1203 = vmul.f32 %v1187, %v706
        %v1204 = vmul.f32 %v1188, %v706
        %v1205 = vmul.f32 %v1189, %v706
        %v1206 = vmul.f32 %v1190, %v706
        %v1207 = vadd.f32 %v1159, %v1191
        %v1208 = vadd.f32 %v1160, %v1192
        %v1209 = vadd.f32 %v1161, %v1193
        %v1210 = vadd.f32 %v1162, %v1194
        %v1211 = vadd.f32 %v1163, %v1195
        %v1212 = vadd.f32 %v1164, %v1196
        %v1213 = vadd.f32 %v1165, %v1197
        %v1214 = vadd.f32 %v1166, %v1198
        %v1215 = vadd.f32 %v1167, %v1199
        %v1216 = vadd.f32 %v1168, %v1200
        %v1217 = vadd.f32 %v1169, %v1201
        %v1218 = vadd.f32 %v1170, %v1202
        %v1219 = vadd.f32 %v1171, %v1203
        %v1220 = vadd.f32 %v1172, %v1204
        %v1221 = vadd.f32 %v1173, %v1205
        %v1222 = vadd.f32 %v1174, %v1206
        %v1223 = vld [vmem:[%s1126 + $0x2] sm:$0xff]
        %v1224 = vld [vmem:[%s1126 + $0xa] sm:$0xff]
        %v1225 = vld [vmem:[%s1126 + $0x1a] sm:$0xff]
        %v1226 = vld [vmem:[%s1126 + $0x22] sm:$0xff]
        %v1227 = vld [vmem:[%s1126 + $0x32] sm:$0xff]
        %v1228 = vld [vmem:[%s1126 + $0x3a] sm:$0xff]
        %v1229 = vld [vmem:[%s1126 + $0x4a] sm:$0xff]
        %v1230 = vld [vmem:[%s1126 + $0x52] sm:$0xff]
        %v1231 = vld [vmem:[%s1126 + $0x62] sm:$0xff]
        %v1232 = vld [vmem:[%s1126 + $0x6a] sm:$0xff]
        %v1233 = vld [vmem:[%s1126 + $0x7a] sm:$0xff]
        %v1234 = vld [vmem:[%s1126 + $0x82] sm:$0xff]
        %v1235 = vld [vmem:[%s1126 + $0x92] sm:$0xff]
        %v1236 = vld [vmem:[%s1126 + $0x9a] sm:$0xff]
        %v1237 = vld [vmem:[%s1126 + $0xaa] sm:$0xff]
        %v1238 = vld [vmem:[%s1126 + $0xb2] sm:$0xff]
        %v1239 = vmul.f32 %v1223, %v758
        %v1240 = vmul.f32 %v1224, %v758
        %v1241 = vmul.f32 %v1225, %v758
        %v1242 = vmul.f32 %v1226, %v758
        %v1243 = vmul.f32 %v1227, %v758
        %v1244 = vmul.f32 %v1228, %v758
        %v1245 = vmul.f32 %v1229, %v758
        %v1246 = vmul.f32 %v1230, %v758
        %v1247 = vmul.f32 %v1231, %v758
        %v1248 = vmul.f32 %v1232, %v758
        %v1249 = vmul.f32 %v1233, %v758
        %v1250 = vmul.f32 %v1234, %v758
        %v1251 = vmul.f32 %v1235, %v758
        %v1252 = vmul.f32 %v1236, %v758
        %v1253 = vmul.f32 %v1237, %v758
        %v1254 = vmul.f32 %v1238, %v758
        %v1255 = vadd.f32 %v1207, %v1239
        %v1256 = vadd.f32 %v1208, %v1240
        %v1257 = vadd.f32 %v1209, %v1241
        %v1258 = vadd.f32 %v1210, %v1242
        %v1259 = vadd.f32 %v1211, %v1243
        %v1260 = vadd.f32 %v1212, %v1244
        %v1261 = vadd.f32 %v1213, %v1245
        %v1262 = vadd.f32 %v1214, %v1246
        %v1263 = vadd.f32 %v1215, %v1247
        %v1264 = vadd.f32 %v1216, %v1248
        %v1265 = vadd.f32 %v1217, %v1249
        %v1266 = vadd.f32 %v1218, %v1250
        %v1267 = vadd.f32 %v1219, %v1251
        %v1268 = vadd.f32 %v1220, %v1252
        %v1269 = vadd.f32 %v1221, %v1253
        %v1270 = vadd.f32 %v1222, %v1254
        %v1271 = vadd.f32 %v1255, %v795
        %v1272 = vadd.f32 %v1256, %v795
        %v1273 = vadd.f32 %v1257, %v795
        %v1274 = vadd.f32 %v1258, %v795
        %v1275 = vadd.f32 %v1259, %v795
        %v1276 = vadd.f32 %v1260, %v795
        %v1277 = vadd.f32 %v1261, %v795
        %v1278 = vadd.f32 %v1262, %v795
        %v1279 = vadd.f32 %v1263, %v795
        %v1280 = vadd.f32 %v1264, %v795
        %v1281 = vadd.f32 %v1265, %v795
        %v1282 = vadd.f32 %v1266, %v795
        %v1283 = vadd.f32 %v1267, %v795
        %v1284 = vadd.f32 %v1268, %v795
        %v1285 = vadd.f32 %v1269, %v795
        %v1286 = vadd.f32 %v1270, %v795
        %s1287 = smul.u32 8, 16
        %s1288 = scalar_lea.vmem %s203, %s1287 [#allocation8]
        %1289 = vst [vmem:[%s1288] sm:$0xff] %v1271
        %1290 = vst [vmem:[%s1288 + $0x8] sm:$0xff] %v1272
        %1291 = vst [vmem:[%s1288 + $0x10] sm:$0xff] %v1273
        %1292 = vst [vmem:[%s1288 + $0x18] sm:$0xff] %v1274
        %1293 = vst [vmem:[%s1288 + $0x20] sm:$0xff] %v1275
        %1294 = vst [vmem:[%s1288 + $0x28] sm:$0xff] %v1276
        %1295 = vst [vmem:[%s1288 + $0x30] sm:$0xff] %v1277
        %1296 = vst [vmem:[%s1288 + $0x38] sm:$0xff] %v1278
        %1297 = vst [vmem:[%s1288 + $0x40] sm:$0xff] %v1279
        %1298 = vst [vmem:[%s1288 + $0x48] sm:$0xff] %v1280
        %1299 = vst [vmem:[%s1288 + $0x50] sm:$0xff] %v1281
        %1300 = vst [vmem:[%s1288 + $0x58] sm:$0xff] %v1282
        %1301 = vst [vmem:[%s1288 + $0x60] sm:$0xff] %v1283
        %1302 = vst [vmem:[%s1288 + $0x68] sm:$0xff] %v1284
        %1303 = vst [vmem:[%s1288 + $0x70] sm:$0xff] %v1285
        %1304 = vst [vmem:[%s1288 + $0x78] sm:$0xff] %v1286
        %s1305 = sand.u32 %s97, 1
        %s1306 = scalar_lea.sflag [#allocation5], %s1305
        %s1307 = sand.u32 %s97, 1
        %s1308 = smul.addr %s1307, 256
        %s1309 = scalar_lea.vmem [#allocation8], %s1308
        // Predicated region
        $region41: #{tpu_custom_call.1} parent=31 // pred_check
          %p1310 = pneg %p107
        $region42: #{tpu_custom_call.1} parent=31 // pred_check_branch
          %1312 = sbr.rel (%p1310) target = $region44
        $region43: #{tpu_custom_call.1} parent=31 // pred_region
          %s1314 = ssub.s32 4096, 4096
          %1315 = vsyncadd %s1306, %s1314
          %s1316 = smul.addr %s21, 32
          %s1317 = smul.addr %s1316, 128
          %s1318 = scalar_lea.hbm %s3, %s1317
          %s1319 = sshll.u32 %s1309, 4
          %s1320 = int_to_ptr.vmem [resolvable:$true] %s1319
          %1325 = dma.vmem_to_hbm [thread:$0]  %s1320, 4096, %s1318, %s1306, 128, 128, 8
        $region44: #{tpu_custom_call.1} parent=31 // pred_fallthru
          _
      $region32: #{tpu_custom_call.1} parent=5 // pred_fallthru
        _
      %p1326 = scmp.le.s32.totalorder 2, %s16
      // Predicated region
      $region45: #{tpu_custom_call.1} parent=5 // pred_check
        %p1327 = pneg %p1326
      $region46: #{tpu_custom_call.1} parent=5 // pred_check_branch
        %1329 = sbr.rel (%p1327) target = $region48
      $region47: #{tpu_custom_call.1} parent=5 // pred_region
        %s1330 = ssub.s32 %s16, 2
        // Predicated region
        $region49: #{tpu_custom_call.1} parent=47 // pred_check
          %p1331 = pneg %p113
        $region50: #{tpu_custom_call.1} parent=47 // pred_check_branch
          %1333 = sbr.rel (%p1331) target = $region52
        $region51: #{tpu_custom_call.1} parent=47 // pred_region
          %s1334 = sand.u32 %s98, 1
          %s1335 = scalar_lea.sflag [#allocation5], %s1334
          %s1336 = sand.u32 %s98, 1
          %s1337 = smul.addr %s1336, 256
          %s1338 = scalar_lea.vmem [#allocation8], %s1337
          %1339 = dma.done %s1335, 4096
        $region52: #{tpu_custom_call.1} parent=47 // pred_fallthru
          _
      $region48: #{tpu_custom_call.1} parent=5 // pred_fallthru
        _
    $region6: #{tpu_custom_call.1} parent=1 // loop_footer
      %s20 = sadd.s32 1, %s16
    $region7: #{tpu_custom_call.1} parent=1 // loop_footer_branch
      %15 = sbr.rel target = $region3
    $region8: #{tpu_custom_call.1} parent=1 // loop_exit
      _
    %1340 = vsyncpa [#allocation4], 1
    %s1341 = scalar_lea.sflag [#allocation4], 1
    %1342 = vsyncpa %s1341, 1
    %1343 = vsyncpa [#allocation7], 1
    %1344 = vsyncpa [#allocation5], 1
    %s1345 = scalar_lea.sflag [#allocation5], 1
    %1346 = vsyncpa %s1345, 1

</llo_original>
